<compile_context>
chip_gen: v7x
topology: tpu7x:2x2x1
jax: 0.10.0
libtpu: 0.0.40
codegen_flags: <defaults>
</compile_context>

<pallas_src>
import jax
import jax.numpy as jnp
from jax import lax
from jax.experimental import pallas as pl
from jax.experimental.pallas import tpu as pltpu

EXPANSION = 4
_LANE = 128
_INV_SQRT2 = 0.7071067811865476


def _gelu(x):
    # exact GELU (erf formulation), matches torch.nn.GELU() default
    return 0.5 * x * (1.0 + lax.erf(x * jnp.float32(_INV_SQRT2)))


def bottleneck_kernel(x_ref, w1_ref, b1_ref, w2_ref, b2_ref, w3_ref, b3_ref,
                      o_ref, hpad_ref):
    # x_ref : (1, H, W, Cpi) f32        o_ref : (1, H, W, Cpe) f32
    # w1_ref: (Cpi, Cp)  bf16           b1_ref: (1, Cp)  f32
    # w2_ref: (9*Cp, Cp) bf16 (im2col)  b2_ref: (1, Cp)  f32
    # w3_ref: (Cp, Cpe)  bf16           b3_ref: (1, Cpe) f32
    # hpad_ref: (H+2, W+2, Cp) f32 scratch holding zero-padded h1
    _, H, W, Cpi = x_ref.shape
    Cp = w1_ref.shape[1]
    Cpe = w3_ref.shape[1]

    # ---- conv_1: 1x1 conv (BN folded) + GELU — bf16 MXU, f32 accumulate ----
    x_bf = x_ref[0].reshape(H * W, Cpi).astype(jnp.bfloat16)
    h1 = _gelu(jnp.dot(x_bf, w1_ref[...], preferred_element_type=jnp.float32)
               + b1_ref[...])                                  # (H*W, Cp) f32

    # ---- conv_2: 3x3 conv, stride 1, pad 1 (BN folded) + GELU --------------
    # Single im2col matmul: zero only the 1-wide halo of the scratch (the
    # interior is fully overwritten every step), write h1 into the interior,
    # read the 9 shifted windows once, lane-concatenate to (H*W, 9*Cp) and do
    # one K=9*Cp dot.
    zr = jnp.zeros((1, W + 2, Cp), jnp.float32)
    zc = jnp.zeros((H + 2, 1, Cp), jnp.float32)
    hpad_ref[0:1, :, :] = zr
    hpad_ref[H + 1:H + 2, :, :] = zr
    hpad_ref[:, 0:1, :] = zc
    hpad_ref[:, W + 1:W + 2, :] = zc
    hpad_ref[1:H + 1, 1:W + 1, :] = h1.reshape(H, W, Cp)

    taps = [hpad_ref[dy:dy + H, dx:dx + W, :].reshape(H * W, Cp)
            for dy in range(3) for dx in range(3)]
    col = jnp.concatenate(taps, axis=1).astype(jnp.bfloat16)   # (H*W, 9*Cp)
    h2 = _gelu(jnp.dot(col, w2_ref[...], preferred_element_type=jnp.float32)
               + b2_ref[...])                                  # (H*W, Cp) f32

    # ---- conv_3: 1x1 conv (BN folded) + residual + GELU --------------------
    h3 = jnp.dot(h2.astype(jnp.bfloat16), w3_ref[...],
                 preferred_element_type=jnp.float32) + b3_ref[...]
    # residual read late (short f32 live range); Cpi == Cpe by construction
    res = x_ref[0].reshape(H * W, Cpi).astype(jnp.float32)
    out = _gelu(h3 + res)
    o_ref[0] = out.reshape(H, W, Cpe).astype(o_ref.dtype)


def _round_up(n, m):
    return ((n + m - 1) // m) * m


def _pad_axis(a, axis, new_size):
    pad = new_size - a.shape[axis]
    if pad == 0:
        return a
    widths = [(0, 0)] * a.ndim
    widths[axis] = (0, pad)
    return jnp.pad(a, widths)


def bottleneck_block(x, w1, b1, w2, b2, w3, b3):
    """Fused bottleneck residual block.  x: (N, H, W, Cin) NHWC f32."""
    N, H, W, Cin = x.shape
    C = w1.shape[1]
    Cexp = w3.shape[1]
    assert Cexp == Cin, "no-downsample residual requires Cin == expansion*C"

    # Lane-dense channel padding: padded channels are all-zero in weights,
    # biases and input, so they contribute nothing and are sliced off below.
    Cpi = _round_up(Cin, _LANE)
    Cp = _round_up(C, _LANE)
    Cpe = _round_up(Cexp, _LANE)
    assert Cpi == Cpe

    xp = _pad_axis(x, 3, Cpi)
    w1p = _pad_axis(_pad_axis(w1, 0, Cpi), 1, Cp).astype(jnp.bfloat16)
    b1p = _pad_axis(b1, 1, Cp).astype(jnp.float32)
    w2p = _pad_axis(_pad_axis(w2, 2, Cp), 3, Cp).astype(jnp.bfloat16)
    w2f = w2p.reshape(9 * Cp, Cp)                      # im2col-flattened 3x3
    b2p = _pad_axis(b2, 1, Cp).astype(jnp.float32)
    w3p = _pad_axis(_pad_axis(w3, 0, Cp), 1, Cpe).astype(jnp.bfloat16)
    b3p = _pad_axis(b3, 1, Cpe).astype(jnp.float32)

    def full(shape):
        return pl.BlockSpec(shape, lambda n: (0,) * len(shape))

    out = pl.pallas_call(
        bottleneck_kernel,
        out_shape=jax.ShapeDtypeStruct((N, H, W, Cpe), x.dtype),
        grid_spec=pltpu.PrefetchScalarGridSpec(
            num_scalar_prefetch=0,
            grid=(N,),
            in_specs=[
                pl.BlockSpec((1, H, W, Cpi), lambda n: (n, 0, 0, 0)),
                full(w1p.shape), full(b1p.shape),
                full(w2f.shape), full(b2p.shape),
                full(w3p.shape), full(b3p.shape),
            ],
            out_specs=pl.BlockSpec((1, H, W, Cpe), lambda n: (n, 0, 0, 0)),
            scratch_shapes=[pltpu.VMEM((H + 2, W + 2, Cp), jnp.float32)],
        ),
        compiler_params=pltpu.CompilerParams(
            dimension_semantics=("parallel",),
            vmem_limit_bytes=48 * 1024 * 1024,
        ),
    )(xp, w1p, b1p, w2f, b2p, w3p, b3p)
    return out[..., :Cexp]


def init_params(key, in_channels, out_channels, eps=1e-5, dtype=jnp.float32):
    """Deterministic synthetic params with eval-mode BatchNorm folded in."""
    C, Cin, Cexp = out_channels, in_channels, out_channels * EXPANSION
    ks = jax.random.split(key, 16)

    w1 = 0.1 * jax.random.normal(ks[0], (Cin, C), dtype)          # conv1 (no bias)
    w2 = 0.1 * jax.random.normal(ks[1], (3, 3, C, C), dtype)      # conv2
    conv2_bias = 0.1 * jax.random.normal(ks[2], (C,), dtype)      # conv2 has bias
    w3 = 0.1 * jax.random.normal(ks[3], (C, Cexp), dtype)         # conv3 (no bias)

    def bn(kg, kb, km, kv, ch):
        gamma = 1.0 + 0.1 * jax.random.normal(kg, (ch,), dtype)
        beta = 0.1 * jax.random.normal(kb, (ch,), dtype)
        mean = 0.1 * jax.random.normal(km, (ch,), dtype)
        var = 0.5 + jax.random.uniform(kv, (ch,), dtype)
        scale = gamma / jnp.sqrt(var + eps)
        shift = beta - mean * scale
        return scale, shift

    s1, sh1 = bn(ks[4], ks[5], ks[6], ks[7], C)
    s2, sh2 = bn(ks[8], ks[9], ks[10], ks[11], C)
    s3, sh3 = bn(ks[12], ks[13], ks[14], ks[15], Cexp)

    w1e = w1 * s1[None, :]
    b1e = sh1[None, :]                                            # (1, C)
    w2e = w2 * s2[None, None, None, :]
    b2e = (s2 * conv2_bias + sh2)[None, :]                        # (1, C)
    w3e = w3 * s3[None, :]
    b3e = sh3[None, :]                                            # (1, Cexp)
    return w1e, b1e, w2e, b2e, w3e, b3e


def reference(x, w1e, b1e, w2e, b2e, w3e, b3e):
    """Pure-JAX reference of the fused block (for correctness check)."""
    N, H, W, _ = x.shape
    h1 = jax.nn.gelu(jnp.einsum("nhwc,cd->nhwd", x, w1e) + b1e, approximate=False)
    hp = jnp.pad(h1, ((0, 0), (1, 1), (1, 1), (0, 0)))
    acc = jnp.zeros((N, H, W, w2e.shape[-1]), jnp.float32) + b2e
    for dy in range(3):
        for dx in range(3):
            acc = acc + jnp.einsum("nhwc,cd->nhwd",
                                   hp[:, dy:dy + H, dx:dx + W, :], w2e[dy, dx])
    h2 = jax.nn.gelu(acc, approximate=False)
    h3 = jnp.einsum("nhwc,cd->nhwd", h2, w3e) + b3e
    return jax.nn.gelu(h3 + x, approximate=False)


if __name__ == "__main__":
    # small shapes consistent with the module: residual (no downsample, stride=1)
    # requires in_channels == out_channels * expansion.
    N, H, W = 2, 8, 8
    out_channels = 4
    in_channels = out_channels * EXPANSION        # 16

    key = jax.random.PRNGKey(0)
    kx, kp = jax.random.split(key)
    x = jax.random.normal(kx, (N, H, W, in_channels), jnp.float32)  # NHWC

    params = init_params(kp, in_channels, out_channels)

    out = bottleneck_block(x, *params)
    out = jax.block_until_ready(out)

    ref = reference(x, *params)
    assert out.shape == (N, H, W, in_channels)
    assert jnp.allclose(out, ref, rtol=2e-2, atol=2e-2), (
        f"max abs diff = {jnp.max(jnp.abs(out - ref))}")

    print("KERNEL_OK")
</pallas_src>

<mosaic_0001>
module attributes {stable_mosaic.version = 11 : i64} {
  func.func @bottleneck_kernel(%arg0: i32, %arg1: memref<1x8x8x128xf32, #tpu.memory_space<vmem>>, %arg2: memref<128x128xbf16, #tpu.memory_space<vmem>>, %arg3: memref<1x128xf32, #tpu.memory_space<vmem>>, %arg4: memref<1152x128xbf16, #tpu.memory_space<vmem>>, %arg5: memref<1x128xf32, #tpu.memory_space<vmem>>, %arg6: memref<128x128xbf16, #tpu.memory_space<vmem>>, %arg7: memref<1x128xf32, #tpu.memory_space<vmem>>, %arg8: memref<1x8x8x128xf32, #tpu.memory_space<vmem>>, %arg9: memref<10x10x128xf32, #tpu.memory_space<vmem>>) attributes {dimension_semantics = [#tpu.dimension_semantics<parallel>], iteration_bounds = array<i64: 2>, scalar_prefetch = 0 : i64, scratch_operands = 1 : i64, tpu.core_type = #tpu.core_type<tc>, window_params = [{transform_indices = @transform_0, window_bounds = array<i64: 1, 8, 8, 128>}, {pipeline_mode = #tpu.pipeline_mode<synchronous>, transform_indices = @transform_1, window_bounds = array<i64: 128, 128>}, {pipeline_mode = #tpu.pipeline_mode<synchronous>, transform_indices = @transform_2, window_bounds = array<i64: 1, 128>}, {pipeline_mode = #tpu.pipeline_mode<synchronous>, transform_indices = @transform_3, window_bounds = array<i64: 1152, 128>}, {pipeline_mode = #tpu.pipeline_mode<synchronous>, transform_indices = @transform_4, window_bounds = array<i64: 1, 128>}, {pipeline_mode = #tpu.pipeline_mode<synchronous>, transform_indices = @transform_5, window_bounds = array<i64: 128, 128>}, {pipeline_mode = #tpu.pipeline_mode<synchronous>, transform_indices = @transform_6, window_bounds = array<i64: 1, 128>}, {transform_indices = @transform_7, window_bounds = array<i64: 1, 8, 8, 128>}]} {
    %c0 = arith.constant 0 : index
    %c0_0 = arith.constant 0 : index
    %c0_1 = arith.constant 0 : index
    %c0_2 = arith.constant 0 : index
    %0 = vector.load %arg1[%c0, %c0_0, %c0_1, %c0_2] : memref<1x8x8x128xf32, #tpu.memory_space<vmem>>, vector<1x8x8x128xf32>
    %1 = vector.shape_cast %0 : vector<1x8x8x128xf32> to vector<8x8x128xf32>
    %2 = vector.shape_cast %1 : vector<8x8x128xf32> to vector<64x128xf32>
    %3 = arith.truncf %2 : vector<64x128xf32> to vector<64x128xbf16>
    %c0_3 = arith.constant 0 : index
    %c0_4 = arith.constant 0 : index
    %4 = vector.load %arg2[%c0_3, %c0_4] : memref<128x128xbf16, #tpu.memory_space<vmem>>, vector<128x128xbf16>
    %cst = arith.constant dense<0.000000e+00> : vector<64x128xf32>
    %5 = tpu.matmul %3, %4, %cst {dimension_numbers = #tpu.dot_dimension_numbers<[1], [0], [0], [1], [0, 0, 1, 1], [], []>} : vector<64x128xbf16>, vector<128x128xbf16>, vector<64x128xf32> -> vector<64x128xf32>
    %c0_5 = arith.constant 0 : index
    %c0_6 = arith.constant 0 : index
    %6 = vector.load %arg3[%c0_5, %c0_6] : memref<1x128xf32, #tpu.memory_space<vmem>>, vector<1x128xf32>
    %7 = vector.broadcast %6 : vector<1x128xf32> to vector<64x128xf32>
    %8 = arith.addf %5, %7 : vector<64x128xf32>
    %cst_7 = arith.constant 5.000000e-01 : f32
    %9 = vector.broadcast %cst_7 : f32 to vector<64x128xf32>
    %10 = arith.mulf %9, %8 : vector<64x128xf32>
    %cst_8 = arith.constant 0.707106769 : f32
    %11 = vector.broadcast %cst_8 : f32 to vector<64x128xf32>
    %12 = arith.mulf %8, %11 : vector<64x128xf32>
    %13 = math.erf %12 : vector<64x128xf32>
    %cst_9 = arith.constant 1.000000e+00 : f32
    %14 = vector.broadcast %cst_9 : f32 to vector<64x128xf32>
    %15 = arith.addf %14, %13 : vector<64x128xf32>
    %16 = arith.mulf %10, %15 : vector<64x128xf32>
    %cst_10 = arith.constant 0.000000e+00 : f32
    %17 = vector.broadcast %cst_10 : f32 to vector<1x10x128xf32>
    %cst_11 = arith.constant 0.000000e+00 : f32
    %18 = vector.broadcast %cst_11 : f32 to vector<10x1x128xf32>
    %c0_12 = arith.constant 0 : index
    %c0_13 = arith.constant 0 : index
    %c0_14 = arith.constant 0 : index
    %19 = vector.load %arg9[%c0_12, %c0_13, %c0_14] : memref<10x10x128xf32, #tpu.memory_space<vmem>>, vector<1x10x128xf32>
    tpu.vector_store %arg9[%c0_12, %c0_13, %c0_14], %17 {strides = array<i32>} : memref<10x10x128xf32, #tpu.memory_space<vmem>>, vector<1x10x128xf32>,
    %c9 = arith.constant 9 : index
    %c0_15 = arith.constant 0 : index
    %c0_16 = arith.constant 0 : index
    %20 = vector.load %arg9[%c9, %c0_15, %c0_16] : memref<10x10x128xf32, #tpu.memory_space<vmem>>, vector<1x10x128xf32>
    tpu.vector_store %arg9[%c9, %c0_15, %c0_16], %17 {strides = array<i32>} : memref<10x10x128xf32, #tpu.memory_space<vmem>>, vector<1x10x128xf32>,
    %c0_17 = arith.constant 0 : index
    %c0_18 = arith.constant 0 : index
    %c0_19 = arith.constant 0 : index
    %21 = vector.load %arg9[%c0_17, %c0_18, %c0_19] : memref<10x10x128xf32, #tpu.memory_space<vmem>>, vector<10x1x128xf32>
    tpu.vector_store %arg9[%c0_17, %c0_18, %c0_19], %18 {strides = array<i32>} : memref<10x10x128xf32, #tpu.memory_space<vmem>>, vector<10x1x128xf32>,
    %c0_20 = arith.constant 0 : index
    %c9_21 = arith.constant 9 : index
    %c0_22 = arith.constant 0 : index
    %22 = vector.load %arg9[%c0_20, %c9_21, %c0_22] : memref<10x10x128xf32, #tpu.memory_space<vmem>>, vector<10x1x128xf32>
    tpu.vector_store %arg9[%c0_20, %c9_21, %c0_22], %18 {strides = array<i32>} : memref<10x10x128xf32, #tpu.memory_space<vmem>>, vector<10x1x128xf32>,
    %23 = vector.shape_cast %16 : vector<64x128xf32> to vector<8x8x128xf32>
    %c1 = arith.constant 1 : index
    %c1_23 = arith.constant 1 : index
    %c0_24 = arith.constant 0 : index
    %24 = vector.load %arg9[%c1, %c1_23, %c0_24] : memref<10x10x128xf32, #tpu.memory_space<vmem>>, vector<8x8x128xf32>
    tpu.vector_store %arg9[%c1, %c1_23, %c0_24], %23 {strides = array<i32>} : memref<10x10x128xf32, #tpu.memory_space<vmem>>, vector<8x8x128xf32>,
    %c0_25 = arith.constant 0 : index
    %c0_26 = arith.constant 0 : index
    %c0_27 = arith.constant 0 : index
    %25 = vector.load %arg9[%c0_25, %c0_26, %c0_27] : memref<10x10x128xf32, #tpu.memory_space<vmem>>, vector<8x8x128xf32>
    %26 = vector.shape_cast %25 : vector<8x8x128xf32> to vector<64x128xf32>
    %c0_28 = arith.constant 0 : index
    %c1_29 = arith.constant 1 : index
    %c0_30 = arith.constant 0 : index
    %27 = vector.load %arg9[%c0_28, %c1_29, %c0_30] : memref<10x10x128xf32, #tpu.memory_space<vmem>>, vector<8x8x128xf32>
    %28 = vector.shape_cast %27 : vector<8x8x128xf32> to vector<64x128xf32>
    %c0_31 = arith.constant 0 : index
    %c2 = arith.constant 2 : index
    %c0_32 = arith.constant 0 : index
    %29 = vector.load %arg9[%c0_31, %c2, %c0_32] : memref<10x10x128xf32, #tpu.memory_space<vmem>>, vector<8x8x128xf32>
    %30 = vector.shape_cast %29 : vector<8x8x128xf32> to vector<64x128xf32>
    %c1_33 = arith.constant 1 : index
    %c0_34 = arith.constant 0 : index
    %c0_35 = arith.constant 0 : index
    %31 = vector.load %arg9[%c1_33, %c0_34, %c0_35] : memref<10x10x128xf32, #tpu.memory_space<vmem>>, vector<8x8x128xf32>
    %32 = vector.shape_cast %31 : vector<8x8x128xf32> to vector<64x128xf32>
    %c1_36 = arith.constant 1 : index
    %c1_37 = arith.constant 1 : index
    %c0_38 = arith.constant 0 : index
    %33 = vector.load %arg9[%c1_36, %c1_37, %c0_38] : memref<10x10x128xf32, #tpu.memory_space<vmem>>, vector<8x8x128xf32>
    %34 = vector.shape_cast %33 : vector<8x8x128xf32> to vector<64x128xf32>
    %c1_39 = arith.constant 1 : index
    %c2_40 = arith.constant 2 : index
    %c0_41 = arith.constant 0 : index
    %35 = vector.load %arg9[%c1_39, %c2_40, %c0_41] : memref<10x10x128xf32, #tpu.memory_space<vmem>>, vector<8x8x128xf32>
    %36 = vector.shape_cast %35 : vector<8x8x128xf32> to vector<64x128xf32>
    %c2_42 = arith.constant 2 : index
    %c0_43 = arith.constant 0 : index
    %c0_44 = arith.constant 0 : index
    %37 = vector.load %arg9[%c2_42, %c0_43, %c0_44] : memref<10x10x128xf32, #tpu.memory_space<vmem>>, vector<8x8x128xf32>
    %38 = vector.shape_cast %37 : vector<8x8x128xf32> to vector<64x128xf32>
    %c2_45 = arith.constant 2 : index
    %c1_46 = arith.constant 1 : index
    %c0_47 = arith.constant 0 : index
    %39 = vector.load %arg9[%c2_45, %c1_46, %c0_47] : memref<10x10x128xf32, #tpu.memory_space<vmem>>, vector<8x8x128xf32>
    %40 = vector.shape_cast %39 : vector<8x8x128xf32> to vector<64x128xf32>
    %c2_48 = arith.constant 2 : index
    %c2_49 = arith.constant 2 : index
    %c0_50 = arith.constant 0 : index
    %41 = vector.load %arg9[%c2_48, %c2_49, %c0_50] : memref<10x10x128xf32, #tpu.memory_space<vmem>>, vector<8x8x128xf32>
    %42 = vector.shape_cast %41 : vector<8x8x128xf32> to vector<64x128xf32>
    %43 = tpu.concatenate %26, %28, %30, %32, %34, %36, %38, %40, %42 in 1 : vector<64x128xf32>, vector<64x128xf32>, vector<64x128xf32>, vector<64x128xf32>, vector<64x128xf32>, vector<64x128xf32>, vector<64x128xf32>, vector<64x128xf32>, vector<64x128xf32> -> vector<64x1152xf32>
    %44 = arith.truncf %43 : vector<64x1152xf32> to vector<64x1152xbf16>
    %c0_51 = arith.constant 0 : index
    %c0_52 = arith.constant 0 : index
    %45 = vector.load %arg4[%c0_51, %c0_52] : memref<1152x128xbf16, #tpu.memory_space<vmem>>, vector<1152x128xbf16>
    %cst_53 = arith.constant dense<0.000000e+00> : vector<64x128xf32>
    %46 = tpu.matmul %44, %45, %cst_53 {dimension_numbers = #tpu.dot_dimension_numbers<[1], [0], [0], [1], [0, 0, 1, 1], [], []>} : vector<64x1152xbf16>, vector<1152x128xbf16>, vector<64x128xf32> -> vector<64x128xf32>
    %c0_54 = arith.constant 0 : index
    %c0_55 = arith.constant 0 : index
    %47 = vector.load %arg5[%c0_54, %c0_55] : memref<1x128xf32, #tpu.memory_space<vmem>>, vector<1x128xf32>
    %48 = vector.broadcast %47 : vector<1x128xf32> to vector<64x128xf32>
    %49 = arith.addf %46, %48 : vector<64x128xf32>
    %cst_56 = arith.constant 5.000000e-01 : f32
    %50 = vector.broadcast %cst_56 : f32 to vector<64x128xf32>
    %51 = arith.mulf %50, %49 : vector<64x128xf32>
    %cst_57 = arith.constant 0.707106769 : f32
    %52 = vector.broadcast %cst_57 : f32 to vector<64x128xf32>
    %53 = arith.mulf %49, %52 : vector<64x128xf32>
    %54 = math.erf %53 : vector<64x128xf32>
    %cst_58 = arith.constant 1.000000e+00 : f32
    %55 = vector.broadcast %cst_58 : f32 to vector<64x128xf32>
    %56 = arith.addf %55, %54 : vector<64x128xf32>
    %57 = arith.mulf %51, %56 : vector<64x128xf32>
    %58 = arith.truncf %57 : vector<64x128xf32> to vector<64x128xbf16>
    %c0_59 = arith.constant 0 : index
    %c0_60 = arith.constant 0 : index
    %59 = vector.load %arg6[%c0_59, %c0_60] : memref<128x128xbf16, #tpu.memory_space<vmem>>, vector<128x128xbf16>
    %cst_61 = arith.constant dense<0.000000e+00> : vector<64x128xf32>
    %60 = tpu.matmul %58, %59, %cst_61 {dimension_numbers = #tpu.dot_dimension_numbers<[1], [0], [0], [1], [0, 0, 1, 1], [], []>} : vector<64x128xbf16>, vector<128x128xbf16>, vector<64x128xf32> -> vector<64x128xf32>
    %c0_62 = arith.constant 0 : index
    %c0_63 = arith.constant 0 : index
    %61 = vector.load %arg7[%c0_62, %c0_63] : memref<1x128xf32, #tpu.memory_space<vmem>>, vector<1x128xf32>
    %62 = vector.broadcast %61 : vector<1x128xf32> to vector<64x128xf32>
    %63 = arith.addf %60, %62 : vector<64x128xf32>
    %c0_64 = arith.constant 0 : index
    %c0_65 = arith.constant 0 : index
    %c0_66 = arith.constant 0 : index
    %c0_67 = arith.constant 0 : index
    %64 = vector.load %arg1[%c0_64, %c0_65, %c0_66, %c0_67] : memref<1x8x8x128xf32, #tpu.memory_space<vmem>>, vector<1x8x8x128xf32>
    %65 = vector.shape_cast %64 : vector<1x8x8x128xf32> to vector<8x8x128xf32>
    %66 = vector.shape_cast %65 : vector<8x8x128xf32> to vector<64x128xf32>
    %67 = arith.addf %63, %66 : vector<64x128xf32>
    %cst_68 = arith.constant 5.000000e-01 : f32
    %68 = vector.broadcast %cst_68 : f32 to vector<64x128xf32>
    %69 = arith.mulf %68, %67 : vector<64x128xf32>
    %cst_69 = arith.constant 0.707106769 : f32
    %70 = vector.broadcast %cst_69 : f32 to vector<64x128xf32>
    %71 = arith.mulf %67, %70 : vector<64x128xf32>
    %72 = math.erf %71 : vector<64x128xf32>
    %cst_70 = arith.constant 1.000000e+00 : f32
    %73 = vector.broadcast %cst_70 : f32 to vector<64x128xf32>
    %74 = arith.addf %73, %72 : vector<64x128xf32>
    %75 = arith.mulf %69, %74 : vector<64x128xf32>
    %76 = vector.shape_cast %75 : vector<64x128xf32> to vector<8x8x128xf32>
    %c0_71 = arith.constant 0 : index
    %c0_72 = arith.constant 0 : index
    %c0_73 = arith.constant 0 : index
    %c0_74 = arith.constant 0 : index
    %77 = vector.load %arg8[%c0_71, %c0_72, %c0_73, %c0_74] : memref<1x8x8x128xf32, #tpu.memory_space<vmem>>, vector<1x8x8x128xf32>
    %78 = vector.shape_cast %77 : vector<1x8x8x128xf32> to vector<8x8x128xf32>
    %79 = vector.shape_cast %76 : vector<8x8x128xf32> to vector<1x8x8x128xf32>
    tpu.vector_store %arg8[%c0_71, %c0_72, %c0_73, %c0_74], %79 {strides = array<i32>} : memref<1x8x8x128xf32, #tpu.memory_space<vmem>>, vector<1x8x8x128xf32>,
    return
  }
  func.func @transform_0(%arg0: i32) -> (i32, i32, i32, i32) {
    %c0_i32 = arith.constant 0 : i32
    %c0_i32_0 = arith.constant 0 : i32
    %c0_i32_1 = arith.constant 0 : i32
    %c0_i32_2 = arith.constant 0 : i32
    return %arg0, %c0_i32, %c0_i32_0, %c0_i32_1 : i32, i32, i32, i32
  }
  func.func @transform_1(%arg0: i32) -> (i32, i32) {
    %c0_i32 = arith.constant 0 : i32
    %c0_i32_0 = arith.constant 0 : i32
    %c0_i32_1 = arith.constant 0 : i32
    return %c0_i32, %c0_i32_0 : i32, i32
  }
  func.func @transform_2(%arg0: i32) -> (i32, i32) {
    %c0_i32 = arith.constant 0 : i32
    %c0_i32_0 = arith.constant 0 : i32
    %c0_i32_1 = arith.constant 0 : i32
    return %c0_i32, %c0_i32_0 : i32, i32
  }
  func.func @transform_3(%arg0: i32) -> (i32, i32) {
    %c0_i32 = arith.constant 0 : i32
    %c0_i32_0 = arith.constant 0 : i32
    %c0_i32_1 = arith.constant 0 : i32
    return %c0_i32, %c0_i32_0 : i32, i32
  }
  func.func @transform_4(%arg0: i32) -> (i32, i32) {
    %c0_i32 = arith.constant 0 : i32
    %c0_i32_0 = arith.constant 0 : i32
    %c0_i32_1 = arith.constant 0 : i32
    return %c0_i32, %c0_i32_0 : i32, i32
  }
  func.func @transform_5(%arg0: i32) -> (i32, i32) {
    %c0_i32 = arith.constant 0 : i32
    %c0_i32_0 = arith.constant 0 : i32
    %c0_i32_1 = arith.constant 0 : i32
    return %c0_i32, %c0_i32_0 : i32, i32
  }
  func.func @transform_6(%arg0: i32) -> (i32, i32) {
    %c0_i32 = arith.constant 0 : i32
    %c0_i32_0 = arith.constant 0 : i32
    %c0_i32_1 = arith.constant 0 : i32
    return %c0_i32, %c0_i32_0 : i32, i32
  }
  func.func @transform_7(%arg0: i32) -> (i32, i32, i32, i32) {
    %c0_i32 = arith.constant 0 : i32
    %c0_i32_0 = arith.constant 0 : i32
    %c0_i32_1 = arith.constant 0 : i32
    %c0_i32_2 = arith.constant 0 : i32
    return %arg0, %c0_i32, %c0_i32_0, %c0_i32_1 : i32, i32, i32, i32
  }
}

</mosaic_0001>

<llo_original>
// kernel: tpu_custom_call.1
$region0: #{tpu_custom_call.1}
  #allocation0 [shape = 'u32[]', space=smem, size = 0x4, offset = 0x4, fixed_abs, tag = 'smem constant byte address 0x4 - core index']
  #allocation1 [shape = 'u32[144,128]{1,0:T(1,128)}', space=vmem, size = 0x12000, scoped, tag = 'internal scratch']
  #allocation2 [shape = 'f32[10,10,128]{2,1,0:T(8,128)}', space=vmem, size = 0x14000, scoped, tag = 'scratch operand']
  %s0 = inlined_call_operand.hbm [shape: f32[2,8,8,128], index: 0, kind: input, shape index: {}]
  %s1 = inlined_call_operand.hbm [shape: bf16[128,128], index: 1, kind: input, shape index: {}]
  %s2 = inlined_call_operand.vmem [shape: f32[1,128], index: 2, kind: input, shape index: {}]
  %s3 = inlined_call_operand.hbm [shape: bf16[1152,128], index: 3, kind: input, shape index: {}]
  %s4 = inlined_call_operand.vmem [shape: f32[1,128], index: 4, kind: input, shape index: {}]
  %s5 = inlined_call_operand.hbm [shape: bf16[128,128], index: 5, kind: input, shape index: {}]
  %s6 = inlined_call_operand.vmem [shape: f32[1,128], index: 6, kind: input, shape index: {}]
  %s7 = inlined_call_operand.hbm [shape: f32[2,8,8,128], index: 7, kind: output, shape index: {}]
  %s8 = sld [smem:[#allocation0]]
  $region77: #{tpu_custom_call.1} parent=0
    _
  %s10 = ssub.s32 1, %s8
  %s11 = scalar_select 0, %s10, %s8
  $region1: #{tpu_custom_call.1} parent=0
    #allocation3 [shape = 'u8[65536]{0}', space=vmem, size = 0x10000, scoped, tag = 'input window, operand 0']
    #allocation4 [shape = 's32[2]{0}', space=sflag, size = 0x8, scoped, tag = 'scoped memory for tpu_custom_call.1']
    #allocation5 [shape = 's32[2]{0}', space=sflag, size = 0x8, scoped, tag = 'scoped memory for tpu_custom_call.1']
    #allocation6 [shape = 'u8[32768]{0}', space=vmem, size = 0x8000, scoped, tag = 'input window, operand 1, single buffered']
    #allocation7 [shape = 's32[1]{0}', space=sflag, size = 0x4, scoped, tag = 'scoped memory for tpu_custom_call.1']
    #allocation8 [shape = 'u8[294912]{0}', space=vmem, size = 0x48000, scoped, tag = 'input window, operand 3, single buffered']
    #allocation9 [shape = 'u8[32768]{0}', space=vmem, size = 0x8000, scoped, tag = 'input window, operand 5, single buffered']
    #allocation10 [shape = 's32[1]{0}', space=sflag, size = 0x4, scoped, tag = 'scoped memory for tpu_custom_call.1']
    #allocation11 [shape = 'u8[65536]{0}', space=vmem, size = 0x10000, scoped, tag = 'output window, operand 0']
    %12 = vsyncpa [#allocation4], 0
    %s13 = scalar_lea.sflag [#allocation4], 1
    %14 = vsyncpa %s13, 0
    %15 = vsyncpa [#allocation7], 0
    %16 = vsyncpa [#allocation10], 0
    %17 = vsyncpa [#allocation5], 0
    %s18 = scalar_lea.sflag [#allocation5], 1
    %19 = vsyncpa %s18, 0
    loop: start=0, step=1, limit=4
    $region2: #{tpu_custom_call.1} parent=1 // loop_pre_header
      _
    $region3: #{tpu_custom_call.1} parent=1 // loop_header
      %s21 = sphi 0, %s25
      %p22 = scmp.ge.s32.totalorder %s21, 4
      %s31 = sphi 0, %s33
      %s34 = sphi 0, %s31
      %s35 = sphi 0, %s34
      %s51 = sphi 0, %s35
      %s55 = sphi 0, %s55
      %s57 = sphi 0, %s55
      %s58 = sphi 0, %s57
      %s72 = sphi 0, %s58
      %s76 = sphi 0, %s76
      %s78 = sphi 0, %s76
      %s79 = sphi 0, %s78
      %s93 = sphi 0, %s79
      %s97 = sphi 0, %s97
      %s99 = sphi 0, %s97
      %s100 = sphi 0, %s99
      %s114 = sphi 0, %s100
      %s118 = sphi 0, %s118
      %s120 = sphi 0, %s118
      %s121 = sphi 0, %s120
      %s135 = sphi 0, %s121
      %s139 = sphi 0, %s139
      %s141 = sphi 0, %s139
      %s142 = sphi 0, %s141
      %s156 = sphi 0, %s142
      %s160 = sphi 0, %s160
      %s162 = sphi 0, %s160
      %s163 = sphi 0, %s162
      %s177 = sphi 0, %s163
      %s183 = sphi 0, %s185
      %s186 = sphi 0, %s183
      %s187 = sphi 0, %s186
      %s203 = sphi 0, %s187
    $region4: #{tpu_custom_call.1} parent=1 // loop_header_branch
      %24 = sbr.rel (%p22) target = $region8
    $region5: #{tpu_custom_call.1} parent=1 // loop_body
      %s26 = ssub.s32 %s21, 1
      %s27 = ssub.s32 %s21, 2
      %s28 = sadd.s32 %s21, 1
      %s29 = ssub.s32 %s21, %s28
      %p30 = scmp.eq.s32.totalorder %s29, 0
      %s32 = sadd.s32 %s31, 1
      %s33 = scalar_select %p30, %s31, %s32
      %p36 = pneg %p30
      %p37 = scmp.eq.s32.totalorder %s21, 1
      %p38 = por %p36, %p37
      %p39 = scmp.ne.s32.totalorder %s31, %s34
      %p40 = scmp.eq.s32.totalorder %s21, 0
      %p41 = por %p39, %p40
      %p42 = scmp.ne.s32.totalorder %s31, %s34
      %p43 = scmp.eq.s32.totalorder %s26, 1
      %p44 = por %p42, %p43
      %p45 = scmp.ne.s32.totalorder %s34, %s35
      %p46 = scmp.eq.s32.totalorder %s26, 0
      %p47 = por %p45, %p46
      %p48 = scmp.ne.s32.totalorder %s34, %s35
      %p49 = scmp.eq.s32.totalorder %s27, 1
      %p50 = por %p48, %p49
      %p52 = scmp.ne.s32.totalorder %s35, %s51
      %p53 = scmp.eq.s32.totalorder %s27, 0
      %p54 = por %p52, %p53
      %s56 = sadd.s32 %s55, 1
      %p59 = scmp.eq.s32.totalorder %s21, 1
      %p60 = scmp.ne.s32.totalorder %s55, %s57
      %p61 = scmp.eq.s32.totalorder %s21, 0
      %p62 = por %p60, %p61
      %p63 = scmp.ne.s32.totalorder %s55, %s57
      %p64 = scmp.eq.s32.totalorder %s26, 1
      %p65 = por %p63, %p64
      %p66 = scmp.ne.s32.totalorder %s57, %s58
      %p67 = scmp.eq.s32.totalorder %s26, 0
      %p68 = por %p66, %p67
      %p69 = scmp.ne.s32.totalorder %s57, %s58
      %p70 = scmp.eq.s32.totalorder %s27, 1
      %p71 = por %p69, %p70
      %p73 = scmp.ne.s32.totalorder %s58, %s72
      %p74 = scmp.eq.s32.totalorder %s27, 0
      %p75 = por %p73, %p74
      %s77 = sadd.s32 %s76, 1
      %p80 = scmp.eq.s32.totalorder %s21, 1
      %p81 = scmp.ne.s32.totalorder %s76, %s78
      %p82 = scmp.eq.s32.totalorder %s21, 0
      %p83 = por %p81, %p82
      %p84 = scmp.ne.s32.totalorder %s76, %s78
      %p85 = scmp.eq.s32.totalorder %s26, 1
      %p86 = por %p84, %p85
      %p87 = scmp.ne.s32.totalorder %s78, %s79
      %p88 = scmp.eq.s32.totalorder %s26, 0
      %p89 = por %p87, %p88
      %p90 = scmp.ne.s32.totalorder %s78, %s79
      %p91 = scmp.eq.s32.totalorder %s27, 1
      %p92 = por %p90, %p91
      %p94 = scmp.ne.s32.totalorder %s79, %s93
      %p95 = scmp.eq.s32.totalorder %s27, 0
      %p96 = por %p94, %p95
      %s98 = sadd.s32 %s97, 1
      %p101 = scmp.eq.s32.totalorder %s21, 1
      %p102 = scmp.ne.s32.totalorder %s97, %s99
      %p103 = scmp.eq.s32.totalorder %s21, 0
      %p104 = por %p102, %p103
      %p105 = scmp.ne.s32.totalorder %s97, %s99
      %p106 = scmp.eq.s32.totalorder %s26, 1
      %p107 = por %p105, %p106
      %p108 = scmp.ne.s32.totalorder %s99, %s100
      %p109 = scmp.eq.s32.totalorder %s26, 0
      %p110 = por %p108, %p109
      %p111 = scmp.ne.s32.totalorder %s99, %s100
      %p112 = scmp.eq.s32.totalorder %s27, 1
      %p113 = por %p111, %p112
      %p115 = scmp.ne.s32.totalorder %s100, %s114
      %p116 = scmp.eq.s32.totalorder %s27, 0
      %p117 = por %p115, %p116
      %s119 = sadd.s32 %s118, 1
      %p122 = scmp.eq.s32.totalorder %s21, 1
      %p123 = scmp.ne.s32.totalorder %s118, %s120
      %p124 = scmp.eq.s32.totalorder %s21, 0
      %p125 = por %p123, %p124
      %p126 = scmp.ne.s32.totalorder %s118, %s120
      %p127 = scmp.eq.s32.totalorder %s26, 1
      %p128 = por %p126, %p127
      %p129 = scmp.ne.s32.totalorder %s120, %s121
      %p130 = scmp.eq.s32.totalorder %s26, 0
      %p131 = por %p129, %p130
      %p132 = scmp.ne.s32.totalorder %s120, %s121
      %p133 = scmp.eq.s32.totalorder %s27, 1
      %p134 = por %p132, %p133
      %p136 = scmp.ne.s32.totalorder %s121, %s135
      %p137 = scmp.eq.s32.totalorder %s27, 0
      %p138 = por %p136, %p137
      %s140 = sadd.s32 %s139, 1
      %p143 = scmp.eq.s32.totalorder %s21, 1
      %p144 = scmp.ne.s32.totalorder %s139, %s141
      %p145 = scmp.eq.s32.totalorder %s21, 0
      %p146 = por %p144, %p145
      %p147 = scmp.ne.s32.totalorder %s139, %s141
      %p148 = scmp.eq.s32.totalorder %s26, 1
      %p149 = por %p147, %p148
      %p150 = scmp.ne.s32.totalorder %s141, %s142
      %p151 = scmp.eq.s32.totalorder %s26, 0
      %p152 = por %p150, %p151
      %p153 = scmp.ne.s32.totalorder %s141, %s142
      %p154 = scmp.eq.s32.totalorder %s27, 1
      %p155 = por %p153, %p154
      %p157 = scmp.ne.s32.totalorder %s142, %s156
      %p158 = scmp.eq.s32.totalorder %s27, 0
      %p159 = por %p157, %p158
      %s161 = sadd.s32 %s160, 1
      %p164 = scmp.eq.s32.totalorder %s21, 1
      %p165 = scmp.ne.s32.totalorder %s160, %s162
      %p166 = scmp.eq.s32.totalorder %s21, 0
      %p167 = por %p165, %p166
      %p168 = scmp.ne.s32.totalorder %s160, %s162
      %p169 = scmp.eq.s32.totalorder %s26, 1
      %p170 = por %p168, %p169
      %p171 = scmp.ne.s32.totalorder %s162, %s163
      %p172 = scmp.eq.s32.totalorder %s26, 0
      %p173 = por %p171, %p172
      %p174 = scmp.ne.s32.totalorder %s162, %s163
      %p175 = scmp.eq.s32.totalorder %s27, 1
      %p176 = por %p174, %p175
      %p178 = scmp.ne.s32.totalorder %s163, %s177
      %p179 = scmp.eq.s32.totalorder %s27, 0
      %p180 = por %p178, %p179
      %s181 = ssub.s32 %s21, %s28
      %p182 = scmp.eq.s32.totalorder %s181, 0
      %s184 = sadd.s32 %s183, 1
      %s185 = scalar_select %p182, %s183, %s184
      %p188 = pneg %p182
      %p189 = scmp.eq.s32.totalorder %s21, 1
      %p190 = por %p188, %p189
      %p191 = scmp.ne.s32.totalorder %s183, %s186
      %p192 = scmp.eq.s32.totalorder %s21, 0
      %p193 = por %p191, %p192
      %p194 = scmp.ne.s32.totalorder %s183, %s186
      %p195 = scmp.eq.s32.totalorder %s26, 1
      %p196 = por %p194, %p195
      %p197 = scmp.ne.s32.totalorder %s186, %s187
      %p198 = scmp.eq.s32.totalorder %s26, 0
      %p199 = por %p197, %p198
      %p200 = scmp.ne.s32.totalorder %s186, %s187
      %p201 = scmp.eq.s32.totalorder %s27, 1
      %p202 = por %p200, %p201
      %p204 = scmp.ne.s32.totalorder %s187, %s203
      %p205 = scmp.eq.s32.totalorder %s27, 0
      %p206 = por %p204, %p205
      %p207 = scmp.le.s32.totalorder 1, %s21
      %p208 = scmp.lt.s32.totalorder %s21, 3
      %p209 = pnand %p207, %p208
      %p210 = pneg %p209
      // Predicated region
      $region9: #{tpu_custom_call.1} parent=5 // pred_check
        _
      $region10: #{tpu_custom_call.1} parent=5 // pred_check_branch
        %212 = sbr.rel (%p209) target = $region12
      $region11: #{tpu_custom_call.1} parent=5 // pred_region
        %s213 = ssub.s32 %s21, 1
        // Predicated region
        $region13: #{tpu_custom_call.1} parent=11 // pred_check
          %p214 = pneg %p68
        $region14: #{tpu_custom_call.1} parent=11 // pred_check_branch
          %216 = sbr.rel (%p214) target = $region16
        $region15: #{tpu_custom_call.1} parent=11 // pred_region
          %s218 = ssub.s32 1024, 1024
          %219 = vsyncadd [#allocation7], %s218
          %s220 = sshll.u32 [#allocation6], 4
          %s221 = int_to_ptr.vmem [resolvable:$true] %s220
          %226 = dma.hbm_to_vmem [thread:$0]  %s1, 1024, %s221, [#allocation7], 64, 64, 4
        $region16: #{tpu_custom_call.1} parent=11 // pred_fallthru
          _
        // Predicated region
        $region17: #{tpu_custom_call.1} parent=11 // pred_check
          %p227 = pneg %p89
        $region18: #{tpu_custom_call.1} parent=11 // pred_check_branch
          %229 = sbr.rel (%p227) target = $region20
        $region19: #{tpu_custom_call.1} parent=11 // pred_region
          _
        $region20: #{tpu_custom_call.1} parent=11 // pred_fallthru
          _
        // Predicated region
        $region21: #{tpu_custom_call.1} parent=11 // pred_check
          %p230 = pneg %p110
        $region22: #{tpu_custom_call.1} parent=11 // pred_check_branch
          %232 = sbr.rel (%p230) target = $region24
        $region23: #{tpu_custom_call.1} parent=11 // pred_region
          %s234 = ssub.s32 9216, 9216
          %235 = vsyncadd [#allocation7], %s234
          %s236 = sshll.u32 [#allocation8], 4
          %s237 = int_to_ptr.vmem [resolvable:$true] %s236
          %242 = dma.hbm_to_vmem [thread:$0]  %s3, 9216, %s237, [#allocation7], 64, 64, 4
        $region24: #{tpu_custom_call.1} parent=11 // pred_fallthru
          _
        // Predicated region
        $region25: #{tpu_custom_call.1} parent=11 // pred_check
          %p243 = pneg %p131
        $region26: #{tpu_custom_call.1} parent=11 // pred_check_branch
          %245 = sbr.rel (%p243) target = $region28
        $region27: #{tpu_custom_call.1} parent=11 // pred_region
          _
        $region28: #{tpu_custom_call.1} parent=11 // pred_fallthru
          _
        // Predicated region
        $region29: #{tpu_custom_call.1} parent=11 // pred_check
          %p246 = pneg %p152
        $region30: #{tpu_custom_call.1} parent=11 // pred_check_branch
          %248 = sbr.rel (%p246) target = $region32
        $region31: #{tpu_custom_call.1} parent=11 // pred_region
          %s250 = ssub.s32 1024, 1024
          %251 = vsyncadd [#allocation10], %s250
          %s252 = sshll.u32 [#allocation9], 4
          %s253 = int_to_ptr.vmem [resolvable:$true] %s252
          %258 = dma.hbm_to_vmem [thread:$0]  %s5, 1024, %s253, [#allocation10], 64, 64, 4
        $region32: #{tpu_custom_call.1} parent=11 // pred_fallthru
          _
        // Predicated region
        $region33: #{tpu_custom_call.1} parent=11 // pred_check
          %p259 = pneg %p173
        $region34: #{tpu_custom_call.1} parent=11 // pred_check_branch
          %261 = sbr.rel (%p259) target = $region36
        $region35: #{tpu_custom_call.1} parent=11 // pred_region
          _
        $region36: #{tpu_custom_call.1} parent=11 // pred_fallthru
          _
      $region12: #{tpu_custom_call.1} parent=5 // pred_fallthru
        _
      %p262 = scmp.lt.s32.totalorder %s21, 2
      // Predicated region
      $region37: #{tpu_custom_call.1} parent=5 // pred_check
        %p263 = pneg %p262
      $region38: #{tpu_custom_call.1} parent=5 // pred_check_branch
        %265 = sbr.rel (%p263) target = $region40
      $region39: #{tpu_custom_call.1} parent=5 // pred_region
        // Predicated region
        $region41: #{tpu_custom_call.1} parent=39 // pred_check
          %p266 = pneg %p41
        $region42: #{tpu_custom_call.1} parent=39 // pred_check_branch
          %268 = sbr.rel (%p266) target = $region44
        $region43: #{tpu_custom_call.1} parent=39 // pred_region
          %s269 = sand.u32 %s31, 1
          %s270 = scalar_lea.sflag [#allocation4], %s269
          %s271 = sand.u32 %s31, 1
          %s272 = smul.addr %s271, 64
          %s273 = scalar_lea.vmem [#allocation3], %s272
          %s275 = ssub.s32 1024, 1024
          %276 = vsyncadd %s270, %s275
          %s277 = smul.addr %s21, 8
          %s278 = smul.addr %s277, 128
          %s279 = scalar_lea.hbm %s0, %s278
          %s280 = sshll.u32 %s273, 4
          %s281 = int_to_ptr.vmem [resolvable:$true] %s280
          %286 = dma.hbm_to_vmem [thread:$0]  %s279, 1024, %s281, %s270, 128, 128, 8
        $region44: #{tpu_custom_call.1} parent=39 // pred_fallthru
          _
      $region40: #{tpu_custom_call.1} parent=5 // pred_fallthru
        _
      %p287 = scmp.le.s32.totalorder 1, %s21
      %p288 = scmp.lt.s32.totalorder %s21, 3
      %p289 = pnand %p287, %p288
      %p290 = pneg %p289
      // Predicated region
      $region45: #{tpu_custom_call.1} parent=5 // pred_check
        _
      $region46: #{tpu_custom_call.1} parent=5 // pred_check_branch
        %292 = sbr.rel (%p289) target = $region48
      $region47: #{tpu_custom_call.1} parent=5 // pred_region
        %s293 = ssub.s32 %s21, 1
        %s294 = sand.u32 %s34, 1
        %s295 = scalar_lea.sflag [#allocation4], %s294
        %s296 = sand.u32 %s34, 1
        %s297 = smul.addr %s296, 64
        %s298 = scalar_lea.vmem [#allocation3], %s297
        // Predicated region
        $region49: #{tpu_custom_call.1} parent=47 // pred_check
          %p299 = pneg %p47
        $region50: #{tpu_custom_call.1} parent=47 // pred_check_branch
          %301 = sbr.rel (%p299) target = $region52
        $region51: #{tpu_custom_call.1} parent=47 // pred_region
          %302 = dma.done %s295, 1024
        $region52: #{tpu_custom_call.1} parent=47 // pred_fallthru
          _
        // Predicated region
        $region53: #{tpu_custom_call.1} parent=47 // pred_check
          %p303 = pneg %p68
        $region54: #{tpu_custom_call.1} parent=47 // pred_check_branch
          %305 = sbr.rel (%p303) target = $region56
        $region55: #{tpu_custom_call.1} parent=47 // pred_region
          %306 = dma.done [#allocation7], 1024
        $region56: #{tpu_custom_call.1} parent=47 // pred_fallthru
          _
        // Predicated region
        $region57: #{tpu_custom_call.1} parent=47 // pred_check
          %p307 = pneg %p110
        $region58: #{tpu_custom_call.1} parent=47 // pred_check_branch
          %309 = sbr.rel (%p307) target = $region60
        $region59: #{tpu_custom_call.1} parent=47 // pred_region
          %310 = dma.done [#allocation7], 9216
        $region60: #{tpu_custom_call.1} parent=47 // pred_fallthru
          _
        // Predicated region
        $region61: #{tpu_custom_call.1} parent=47 // pred_check
          %p311 = pneg %p152
        $region62: #{tpu_custom_call.1} parent=47 // pred_check_branch
          %313 = sbr.rel (%p311) target = $region64
        $region63: #{tpu_custom_call.1} parent=47 // pred_region
          %314 = dma.done [#allocation10], 1024
        $region64: #{tpu_custom_call.1} parent=47 // pred_fallthru
          _
        %s315 = sand.u32 %s34, 1
        %s316 = scalar_lea.sflag [#allocation4], %s315
        %s317 = sand.u32 %s34, 1
        %s318 = smul.addr %s317, 64
        %s319 = scalar_lea.vmem [#allocation3], %s318
        %p320 = pneg %p47
        %p321 = pneg %p44
        %p322 = pneg %p68
        %p323 = pneg %p65
        %p324 = pneg %p89
        %p325 = pneg %p86
        %p326 = pneg %p110
        %p327 = pneg %p107
        %p328 = pneg %p131
        %p329 = pneg %p128
        %p330 = pneg %p152
        %p331 = pneg %p149
        %p332 = pneg %p173
        %p333 = pneg %p170
        %p334 = pneg %p199
        %p335 = pneg %p196
        %s336 = sand.u32 %s186, 1
        %s337 = scalar_lea.sflag [#allocation5], %s336
        %s338 = sand.u32 %s186, 1
        %s339 = smul.addr %s338, 64
        %s340 = scalar_lea.vmem [#allocation11], %s339
        %v342 = vld [vmem:[%s298] sm:$0xff]
        %v343 = vld [vmem:[%s298 + $0x8] sm:$0xff]
        %v344 = vld [vmem:[%s298 + $0x10] sm:$0xff]
        %v345 = vld [vmem:[%s298 + $0x18] sm:$0xff]
        %v346 = vld [vmem:[%s298 + $0x20] sm:$0xff]
        %v347 = vld [vmem:[%s298 + $0x28] sm:$0xff]
        %v348 = vld [vmem:[%s298 + $0x30] sm:$0xff]
        %v349 = vld [vmem:[%s298 + $0x38] sm:$0xff]
        %v350 = vpack.c.bf16 %v343, %v342
        %v351 = vpack.c.bf16 %v345, %v344
        %v352 = vpack.c.bf16 %v347, %v346
        %v353 = vpack.c.bf16 %v349, %v348
        %v354 = vld [vmem:[#allocation6] sm:$0xf]
        %v355 = vld [vmem:[#allocation6 + $0x4] sm:$0xf]
        %v356 = vld [vmem:[#allocation6 + $0x8] sm:$0xf]
        %v357 = vld [vmem:[#allocation6 + $0xc] sm:$0xf]
        %v358 = vld [vmem:[#allocation6 + $0x10] sm:$0xf]
        %v359 = vld [vmem:[#allocation6 + $0x14] sm:$0xf]
        %v360 = vld [vmem:[#allocation6 + $0x18] sm:$0xf]
        %v361 = vld [vmem:[#allocation6 + $0x1c] sm:$0xf]
        %v362 = vld [vmem:[#allocation6 + $0x20] sm:$0xf]
        %v363 = vld [vmem:[#allocation6 + $0x24] sm:$0xf]
        %v364 = vld [vmem:[#allocation6 + $0x28] sm:$0xf]
        %v365 = vld [vmem:[#allocation6 + $0x2c] sm:$0xf]
        %v366 = vld [vmem:[#allocation6 + $0x30] sm:$0xf]
        %v367 = vld [vmem:[#allocation6 + $0x34] sm:$0xf]
        %v368 = vld [vmem:[#allocation6 + $0x38] sm:$0xf]
        %v369 = vld [vmem:[#allocation6 + $0x3c] sm:$0xf]
        %v370 = vld [vmem:[%s2] sm:$0x1]
        %v372 = vlaneseq
        %v373 = vshrl.u32 %v372, 7
        %v374 = vsub.s32 0, %v373
        %v375 = vrot.slane %v370, %v374
        %v393 = vunpack.c.l.b16 %v354
        %v394 = vunpack.c.l.b16 %v355
        %v395 = vunpack.c.l.b16 %v356
        %v396 = vunpack.c.l.b16 %v357
        %v397 = vunpack.c.l.b16 %v358
        %v398 = vunpack.c.l.b16 %v359
        %v399 = vunpack.c.l.b16 %v360
        %v400 = vunpack.c.l.b16 %v361
        %v401 = vunpack.c.l.b16 %v362
        %v402 = vunpack.c.l.b16 %v363
        %v403 = vunpack.c.l.b16 %v364
        %v404 = vunpack.c.l.b16 %v365
        %v405 = vunpack.c.l.b16 %v366
        %v406 = vunpack.c.l.b16 %v367
        %v407 = vunpack.c.l.b16 %v368
        %v408 = vunpack.c.l.b16 %v369
        %v409 = vpack.c.b16 %v394, %v393
        %v410 = vpack.c.b16 %v396, %v395
        %v411 = vpack.c.b16 %v398, %v397
        %v412 = vpack.c.b16 %v400, %v399
        %v413 = vpack.c.b16 %v402, %v401
        %v414 = vpack.c.b16 %v404, %v403
        %v415 = vpack.c.b16 %v406, %v405
        %v416 = vpack.c.b16 %v408, %v407
        %425 = vmatprep.subr.bf16.mxu0 0
        %426 = vmatpush1.bf16.msra.mxu0 %v409
        %427 = vmatprep.subr.bf16.mxu0 0
        %428 = vmatpush1.bf16.msra.mxu0 %v410
        %429 = vmatprep.subr.bf16.mxu0 0
        %430 = vmatpush1.bf16.msra.mxu0 %v411
        %431 = vmatprep.subr.bf16.mxu0 0
        %432 = vmatpush1.bf16.msra.mxu0 %v412
        %433 = vmatprep.subr.bf16.mxu0 0
        %434 = vmatpush1.bf16.msra.mxu0 %v413
        %435 = vmatprep.subr.bf16.mxu0 0
        %436 = vmatpush1.bf16.msra.mxu0 %v414
        %437 = vmatprep.subr.bf16.mxu0 0
        %438 = vmatpush1.bf16.msra.mxu0 %v415
        %439 = vmatprep.subr.bf16.mxu0 0
        %440 = vmatpush1.bf16.msra.mxu0 %v416
        %441 = vmatprep.subr.bf16.mxu0 0
        %442 = vmatpush1.bf16.msra.mxu0 0
        %443 = vmatprep.subr.bf16.mxu0 0
        %444 = vmatpush1.bf16.msra.mxu0 0
        %445 = vmatprep.subr.bf16.mxu0 0
        %446 = vmatpush1.bf16.msra.mxu0 0
        %447 = vmatprep.subr.bf16.mxu0 0
        %448 = vmatpush1.bf16.msra.mxu0 0
        %449 = vmatprep.subr.bf16.mxu0 0
        %450 = vmatpush1.bf16.msra.mxu0 0
        %451 = vmatprep.subr.bf16.mxu0 0
        %452 = vmatpush1.bf16.msra.mxu0 0
        %453 = vmatprep.subr.bf16.mxu0 0
        %454 = vmatpush1.bf16.msra.mxu0 0
        %455 = vmatprep.subr.bf16.mxu0 0
        %456 = vmatpush1.bf16.msra.mxu0 0
        %457 = vmatprep.mubr.bf16.mxu0 0
        %458 = vmatmul.mubr.bf16.gmra.mrb[0].mxu0 %v350
        %v459 = vpop.f32.mrb[0].mxu0
        %v460 = vadd.f32 %v375, %v459
        %v461 = vpop.f32.mrb[0].mxu0
        %v462 = vpop.f32.mrb[0].mxu0
        %v463 = vadd.f32 %v375, %v462
        %v464 = vpop.f32.mrb[0].mxu0
        %465 = vmatprep.mubr.bf16.mxu0 0
        %466 = vmatmul.mubr.bf16.gmra.mrb[0].mxu0 %v351
        %v467 = vpop.f32.mrb[0].mxu0
        %v468 = vadd.f32 %v375, %v467
        %v469 = vpop.f32.mrb[0].mxu0
        %v470 = vpop.f32.mrb[0].mxu0
        %v471 = vadd.f32 %v375, %v470
        %v472 = vpop.f32.mrb[0].mxu0
        %473 = vmatprep.mubr.bf16.mxu0 0
        %474 = vmatmul.mubr.bf16.gmra.mrb[0].mxu0 %v352
        %v475 = vpop.f32.mrb[0].mxu0
        %v476 = vadd.f32 %v375, %v475
        %v477 = vpop.f32.mrb[0].mxu0
        %v478 = vpop.f32.mrb[0].mxu0
        %v479 = vadd.f32 %v375, %v478
        %v480 = vpop.f32.mrb[0].mxu0
        %481 = vmatprep.mubr.bf16.mxu0 0
        %482 = vmatmul.mubr.bf16.gmra.mrb[0].mxu0 %v353
        %v483 = vpop.f32.mrb[0].mxu0
        %v484 = vadd.f32 %v375, %v483
        %v485 = vpop.f32.mrb[0].mxu0
        %v486 = vpop.f32.mrb[0].mxu0
        %v487 = vadd.f32 %v375, %v486
        %v488 = vpop.f32.mrb[0].mxu0
        %489 = vdwg.mxu0
        %v490 = vmul.f32 %v460, 0.5
        %v491 = vmul.f32 %v463, 0.5
        %v492 = vmul.f32 %v468, 0.5
        %v493 = vmul.f32 %v471, 0.5
        %v494 = vmul.f32 %v476, 0.5
        %v495 = vmul.f32 %v479, 0.5
        %v496 = vmul.f32 %v484, 0.5
        %v497 = vmul.f32 %v487, 0.5
        %v498 = vmul.f32 %v460, 0.70710677
        %v499 = vmul.f32 %v463, 0.70710677
        %v500 = vmul.f32 %v468, 0.70710677
        %v501 = vmul.f32 %v471, 0.70710677
        %v502 = vmul.f32 %v476, 0.70710677
        %v503 = vmul.f32 %v479, 0.70710677
        %v504 = vmul.f32 %v484, 0.70710677
        %v505 = vmul.f32 %v487, 0.70710677
        %v506 = verf.f32.pop %v498
        %v507 = verf.f32.pop %v499
        %v508 = verf.f32.pop %v500
        %v509 = verf.f32.pop %v501
        %v510 = verf.f32.pop %v502
        %v511 = verf.f32.pop %v503
        %v512 = verf.f32.pop %v504
        %v513 = verf.f32.pop %v505
        %v514 = vadd.f32 %v506, 1.0
        %v515 = vadd.f32 %v507, 1.0
        %v516 = vadd.f32 %v508, 1.0
        %v517 = vadd.f32 %v509, 1.0
        %v518 = vadd.f32 %v510, 1.0
        %v519 = vadd.f32 %v511, 1.0
        %v520 = vadd.f32 %v512, 1.0
        %v521 = vadd.f32 %v513, 1.0
        %v522 = vmul.f32 %v490, %v514
        %v523 = vmul.f32 %v491, %v515
        %v524 = vmul.f32 %v492, %v516
        %v525 = vmul.f32 %v493, %v517
        %v526 = vmul.f32 %v494, %v518
        %v527 = vmul.f32 %v495, %v519
        %v528 = vmul.f32 %v496, %v520
        %v529 = vmul.f32 %v497, %v521
        %530 = vst [vmem:[#allocation2] sm:$0xff] 0.0
        %531 = vst [vmem:[#allocation2 + $0x8] sm:$0x3] 0.0
        %s532 = scalar_lea.vmem [#allocation2], 144
        %533 = vst [vmem:[%s532] sm:$0xff] 0.0
        %534 = vst [vmem:[%s532 + $0x8] sm:$0x3] 0.0
        %535 = vst [vmem:[#allocation2] sm:$0x1] 0.0
        %536 = vst [vmem:[#allocation2 + $0x10] sm:$0x1] 0.0
        %537 = vst [vmem:[#allocation2 + $0x20] sm:$0x1] 0.0
        %538 = vst [vmem:[#allocation2 + $0x30] sm:$0x1] 0.0
        %539 = vst [vmem:[#allocation2 + $0x40] sm:$0x1] 0.0
        %540 = vst [vmem:[#allocation2 + $0x50] sm:$0x1] 0.0
        %541 = vst [vmem:[#allocation2 + $0x60] sm:$0x1] 0.0
        %542 = vst [vmem:[#allocation2 + $0x70] sm:$0x1] 0.0
        %543 = vst [vmem:[#allocation2 + $0x80] sm:$0x1] 0.0
        %544 = vst [vmem:[#allocation2 + $0x90] sm:$0x1] 0.0
        %545 = vst [vmem:[#allocation2 + $0x9] sm:$0x1] 0.0
        %546 = vst [vmem:[#allocation2 + $0x19] sm:$0x1] 0.0
        %547 = vst [vmem:[#allocation2 + $0x29] sm:$0x1] 0.0
        %548 = vst [vmem:[#allocation2 + $0x39] sm:$0x1] 0.0
        %549 = vst [vmem:[#allocation2 + $0x49] sm:$0x1] 0.0
        %550 = vst [vmem:[#allocation2 + $0x59] sm:$0x1] 0.0
        %551 = vst [vmem:[#allocation2 + $0x69] sm:$0x1] 0.0
        %552 = vst [vmem:[#allocation2 + $0x79] sm:$0x1] 0.0
        %553 = vst [vmem:[#allocation2 + $0x89] sm:$0x1] 0.0
        %554 = vst [vmem:[#allocation2 + $0x99] sm:$0x1] 0.0
        %s555 = scalar_lea.vmem [#allocation2], 16
        %556 = vst [vmem:[%s555 + $0x1] sm:$0xff] %v522
        %557 = vst [vmem:[%s555 + $0x11] sm:$0xff] %v523
        %558 = vst [vmem:[%s555 + $0x21] sm:$0xff] %v524
        %559 = vst [vmem:[%s555 + $0x31] sm:$0xff] %v525
        %560 = vst [vmem:[%s555 + $0x41] sm:$0xff] %v526
        %561 = vst [vmem:[%s555 + $0x51] sm:$0xff] %v527
        %562 = vst [vmem:[%s555 + $0x61] sm:$0xff] %v528
        %563 = vst [vmem:[%s555 + $0x71] sm:$0xff] %v529
        %v564 = vld [vmem:[#allocation2] sm:$0xff]
        %v565 = vld [vmem:[#allocation2 + $0x10] sm:$0xff]
        %v566 = vld [vmem:[#allocation2 + $0x20] sm:$0xff]
        %v567 = vld [vmem:[#allocation2 + $0x30] sm:$0xff]
        %v568 = vld [vmem:[#allocation2 + $0x40] sm:$0xff]
        %v569 = vld [vmem:[#allocation2 + $0x50] sm:$0xff]
        %v570 = vld [vmem:[#allocation2 + $0x60] sm:$0xff]
        %v571 = vld [vmem:[#allocation2 + $0x70] sm:$0xff]
        %v572 = vld [vmem:[#allocation2 + $0x1] sm:$0xff]
        %v573 = vld [vmem:[#allocation2 + $0x11] sm:$0xff]
        %v574 = vld [vmem:[#allocation2 + $0x21] sm:$0xff]
        %v575 = vld [vmem:[#allocation2 + $0x31] sm:$0xff]
        %v576 = vld [vmem:[#allocation2 + $0x41] sm:$0xff]
        %v577 = vld [vmem:[#allocation2 + $0x51] sm:$0xff]
        %v578 = vld [vmem:[#allocation2 + $0x61] sm:$0xff]
        %v579 = vld [vmem:[#allocation2 + $0x71] sm:$0xff]
        %v580 = vld [vmem:[#allocation2 + $0x2] sm:$0xff]
        %v581 = vld [vmem:[#allocation2 + $0x12] sm:$0xff]
        %v582 = vld [vmem:[#allocation2 + $0x22] sm:$0xff]
        %v583 = vld [vmem:[#allocation2 + $0x32] sm:$0xff]
        %v584 = vld [vmem:[#allocation2 + $0x42] sm:$0xff]
        %v585 = vld [vmem:[#allocation2 + $0x52] sm:$0xff]
        %v586 = vld [vmem:[#allocation2 + $0x62] sm:$0xff]
        %v587 = vld [vmem:[#allocation2 + $0x72] sm:$0xff]
        %v588 = vld [vmem:[%s555] sm:$0xff]
        %v589 = vld [vmem:[%s555 + $0x10] sm:$0xff]
        %v590 = vld [vmem:[%s555 + $0x20] sm:$0xff]
        %v591 = vld [vmem:[%s555 + $0x30] sm:$0xff]
        %v592 = vld [vmem:[%s555 + $0x40] sm:$0xff]
        %v593 = vld [vmem:[%s555 + $0x50] sm:$0xff]
        %v594 = vld [vmem:[%s555 + $0x60] sm:$0xff]
        %v595 = vld [vmem:[%s555 + $0x70] sm:$0xff]
        %v596 = vld [vmem:[%s555 + $0x1] sm:$0xff]
        %v597 = vld [vmem:[%s555 + $0x11] sm:$0xff]
        %v598 = vld [vmem:[%s555 + $0x21] sm:$0xff]
        %v599 = vld [vmem:[%s555 + $0x31] sm:$0xff]
        %v600 = vld [vmem:[%s555 + $0x41] sm:$0xff]
        %v601 = vld [vmem:[%s555 + $0x51] sm:$0xff]
        %v602 = vld [vmem:[%s555 + $0x61] sm:$0xff]
        %v603 = vld [vmem:[%s555 + $0x71] sm:$0xff]
        %v604 = vld [vmem:[%s555 + $0x2] sm:$0xff]
        %v605 = vld [vmem:[%s555 + $0x12] sm:$0xff]
        %v606 = vld [vmem:[%s555 + $0x22] sm:$0xff]
        %v607 = vld [vmem:[%s555 + $0x32] sm:$0xff]
        %v608 = vld [vmem:[%s555 + $0x42] sm:$0xff]
        %v609 = vld [vmem:[%s555 + $0x52] sm:$0xff]
        %v610 = vld [vmem:[%s555 + $0x62] sm:$0xff]
        %v611 = vld [vmem:[%s555 + $0x72] sm:$0xff]
        %s612 = scalar_lea.vmem [#allocation2], 32
        %v613 = vld [vmem:[%s612] sm:$0xff]
        %v614 = vld [vmem:[%s612 + $0x10] sm:$0xff]
        %v615 = vld [vmem:[%s612 + $0x20] sm:$0xff]
        %v616 = vld [vmem:[%s612 + $0x30] sm:$0xff]
        %v617 = vld [vmem:[%s612 + $0x40] sm:$0xff]
        %v618 = vld [vmem:[%s612 + $0x50] sm:$0xff]
        %v619 = vld [vmem:[%s612 + $0x60] sm:$0xff]
        %v620 = vld [vmem:[%s612 + $0x70] sm:$0xff]
        %v621 = vld [vmem:[%s612 + $0x1] sm:$0xff]
        %v622 = vld [vmem:[%s612 + $0x11] sm:$0xff]
        %v623 = vld [vmem:[%s612 + $0x21] sm:$0xff]
        %v624 = vld [vmem:[%s612 + $0x31] sm:$0xff]
        %v625 = vld [vmem:[%s612 + $0x41] sm:$0xff]
        %v626 = vld [vmem:[%s612 + $0x51] sm:$0xff]
        %v627 = vld [vmem:[%s612 + $0x61] sm:$0xff]
        %v628 = vld [vmem:[%s612 + $0x71] sm:$0xff]
        %v629 = vld [vmem:[%s612 + $0x2] sm:$0xff]
        %v630 = vld [vmem:[%s612 + $0x12] sm:$0xff]
        %v631 = vld [vmem:[%s612 + $0x22] sm:$0xff]
        %v632 = vld [vmem:[%s612 + $0x32] sm:$0xff]
        %v633 = vld [vmem:[%s612 + $0x42] sm:$0xff]
        %v634 = vld [vmem:[%s612 + $0x52] sm:$0xff]
        %v635 = vld [vmem:[%s612 + $0x62] sm:$0xff]
        %v636 = vld [vmem:[%s612 + $0x72] sm:$0xff]
        %v637 = vpack.c.bf16 %v565, %v564
        %v638 = vpack.c.bf16 %v573, %v572
        %v639 = vpack.c.bf16 %v581, %v580
        %v640 = vpack.c.bf16 %v589, %v588
        %v641 = vpack.c.bf16 %v597, %v596
        %v642 = vpack.c.bf16 %v605, %v604
        %v643 = vpack.c.bf16 %v614, %v613
        %v644 = vpack.c.bf16 %v622, %v621
        %v645 = vpack.c.bf16 %v630, %v629
        %v646 = vpack.c.bf16 %v567, %v566
        %v647 = vpack.c.bf16 %v575, %v574
        %v648 = vpack.c.bf16 %v583, %v582
        %v649 = vpack.c.bf16 %v591, %v590
        %v650 = vpack.c.bf16 %v599, %v598
        %v651 = vpack.c.bf16 %v607, %v606
        %v652 = vpack.c.bf16 %v616, %v615
        %v653 = vpack.c.bf16 %v624, %v623
        %v654 = vpack.c.bf16 %v632, %v631
        %v655 = vpack.c.bf16 %v569, %v568
        %v656 = vpack.c.bf16 %v577, %v576
        %v657 = vpack.c.bf16 %v585, %v584
        %v658 = vpack.c.bf16 %v593, %v592
        %v659 = vpack.c.bf16 %v601, %v600
        %v660 = vpack.c.bf16 %v609, %v608
        %v661 = vpack.c.bf16 %v618, %v617
        %v662 = vpack.c.bf16 %v626, %v625
        %v663 = vpack.c.bf16 %v634, %v633
        %v664 = vpack.c.bf16 %v571, %v570
        %v665 = vpack.c.bf16 %v579, %v578
        %v666 = vpack.c.bf16 %v587, %v586
        %v667 = vpack.c.bf16 %v595, %v594
        %v668 = vpack.c.bf16 %v603, %v602
        %v669 = vpack.c.bf16 %v611, %v610
        %v670 = vpack.c.bf16 %v620, %v619
        %v671 = vpack.c.bf16 %v628, %v627
        %v672 = vpack.c.bf16 %v636, %v635
        %v673 = vld [vmem:[#allocation8] sm:$0xf]
        %v674 = vld [vmem:[#allocation8 + $0x4] sm:$0xf]
        %v675 = vld [vmem:[#allocation8 + $0x8] sm:$0xf]
        %v676 = vld [vmem:[#allocation8 + $0xc] sm:$0xf]
        %v677 = vld [vmem:[#allocation8 + $0x10] sm:$0xf]
        %v678 = vld [vmem:[#allocation8 + $0x14] sm:$0xf]
        %v679 = vld [vmem:[#allocation8 + $0x18] sm:$0xf]
        %v680 = vld [vmem:[#allocation8 + $0x1c] sm:$0xf]
        %v681 = vld [vmem:[#allocation8 + $0x20] sm:$0xf]
        %v682 = vld [vmem:[#allocation8 + $0x24] sm:$0xf]
        %v683 = vld [vmem:[#allocation8 + $0x28] sm:$0xf]
        %v684 = vld [vmem:[#allocation8 + $0x2c] sm:$0xf]
        %v685 = vld [vmem:[#allocation8 + $0x30] sm:$0xf]
        %v686 = vld [vmem:[#allocation8 + $0x34] sm:$0xf]
        %v687 = vld [vmem:[#allocation8 + $0x38] sm:$0xf]
        %v688 = vld [vmem:[#allocation8 + $0x3c] sm:$0xf]
        %v689 = vld [vmem:[#allocation8 + $0x40] sm:$0xf]
        %v690 = vld [vmem:[#allocation8 + $0x44] sm:$0xf]
        %v691 = vld [vmem:[#allocation8 + $0x48] sm:$0xf]
        %v692 = vld [vmem:[#allocation8 + $0x4c] sm:$0xf]
        %v693 = vld [vmem:[#allocation8 + $0x50] sm:$0xf]
        %v694 = vld [vmem:[#allocation8 + $0x54] sm:$0xf]
        %v695 = vld [vmem:[#allocation8 + $0x58] sm:$0xf]
        %v696 = vld [vmem:[#allocation8 + $0x5c] sm:$0xf]
        %v697 = vld [vmem:[#allocation8 + $0x60] sm:$0xf]
        %v698 = vld [vmem:[#allocation8 + $0x64] sm:$0xf]
        %v699 = vld [vmem:[#allocation8 + $0x68] sm:$0xf]
        %v700 = vld [vmem:[#allocation8 + $0x6c] sm:$0xf]
        %v701 = vld [vmem:[#allocation8 + $0x70] sm:$0xf]
        %v702 = vld [vmem:[#allocation8 + $0x74] sm:$0xf]
        %v703 = vld [vmem:[#allocation8 + $0x78] sm:$0xf]
        %v704 = vld [vmem:[#allocation8 + $0x7c] sm:$0xf]
        %v705 = vld [vmem:[#allocation8 + $0x80] sm:$0xf]
        %v706 = vld [vmem:[#allocation8 + $0x84] sm:$0xf]
        %v707 = vld [vmem:[#allocation8 + $0x88] sm:$0xf]
        %v708 = vld [vmem:[#allocation8 + $0x8c] sm:$0xf]
        %v709 = vld [vmem:[#allocation8 + $0x90] sm:$0xf]
        %v710 = vld [vmem:[#allocation8 + $0x94] sm:$0xf]
        %v711 = vld [vmem:[#allocation8 + $0x98] sm:$0xf]
        %v712 = vld [vmem:[#allocation8 + $0x9c] sm:$0xf]
        %v713 = vld [vmem:[#allocation8 + $0xa0] sm:$0xf]
        %v714 = vld [vmem:[#allocation8 + $0xa4] sm:$0xf]
        %v715 = vld [vmem:[#allocation8 + $0xa8] sm:$0xf]
        %v716 = vld [vmem:[#allocation8 + $0xac] sm:$0xf]
        %v717 = vld [vmem:[#allocation8 + $0xb0] sm:$0xf]
        %v718 = vld [vmem:[#allocation8 + $0xb4] sm:$0xf]
        %v719 = vld [vmem:[#allocation8 + $0xb8] sm:$0xf]
        %v720 = vld [vmem:[#allocation8 + $0xbc] sm:$0xf]
        %v721 = vld [vmem:[#allocation8 + $0xc0] sm:$0xf]
        %v722 = vld [vmem:[#allocation8 + $0xc4] sm:$0xf]
        %v723 = vld [vmem:[#allocation8 + $0xc8] sm:$0xf]
        %v724 = vld [vmem:[#allocation8 + $0xcc] sm:$0xf]
        %v725 = vld [vmem:[#allocation8 + $0xd0] sm:$0xf]
        %v726 = vld [vmem:[#allocation8 + $0xd4] sm:$0xf]
        %v727 = vld [vmem:[#allocation8 + $0xd8] sm:$0xf]
        %v728 = vld [vmem:[#allocation8 + $0xdc] sm:$0xf]
        %v729 = vld [vmem:[#allocation8 + $0xe0] sm:$0xf]
        %v730 = vld [vmem:[#allocation8 + $0xe4] sm:$0xf]
        %v731 = vld [vmem:[#allocation8 + $0xe8] sm:$0xf]
        %v732 = vld [vmem:[#allocation8 + $0xec] sm:$0xf]
        %v733 = vld [vmem:[#allocation8 + $0xf0] sm:$0xf]
        %v734 = vld [vmem:[#allocation8 + $0xf4] sm:$0xf]
        %v735 = vld [vmem:[#allocation8 + $0xf8] sm:$0xf]
        %v736 = vld [vmem:[#allocation8 + $0xfc] sm:$0xf]
        %v737 = vld [vmem:[#allocation8 + $0x100] sm:$0xf]
        %v738 = vld [vmem:[#allocation8 + $0x104] sm:$0xf]
        %v739 = vld [vmem:[#allocation8 + $0x108] sm:$0xf]
        %v740 = vld [vmem:[#allocation8 + $0x10c] sm:$0xf]
        %v741 = vld [vmem:[#allocation8 + $0x110] sm:$0xf]
        %v742 = vld [vmem:[#allocation8 + $0x114] sm:$0xf]
        %v743 = vld [vmem:[#allocation8 + $0x118] sm:$0xf]
        %v744 = vld [vmem:[#allocation8 + $0x11c] sm:$0xf]
        %v745 = vld [vmem:[#allocation8 + $0x120] sm:$0xf]
        %v746 = vld [vmem:[#allocation8 + $0x124] sm:$0xf]
        %v747 = vld [vmem:[#allocation8 + $0x128] sm:$0xf]
        %v748 = vld [vmem:[#allocation8 + $0x12c] sm:$0xf]
        %v749 = vld [vmem:[#allocation8 + $0x130] sm:$0xf]
        %v750 = vld [vmem:[#allocation8 + $0x134] sm:$0xf]
        %v751 = vld [vmem:[#allocation8 + $0x138] sm:$0xf]
        %v752 = vld [vmem:[#allocation8 + $0x13c] sm:$0xf]
        %v753 = vld [vmem:[#allocation8 + $0x140] sm:$0xf]
        %v754 = vld [vmem:[#allocation8 + $0x144] sm:$0xf]
        %v755 = vld [vmem:[#allocation8 + $0x148] sm:$0xf]
        %v756 = vld [vmem:[#allocation8 + $0x14c] sm:$0xf]
        %v757 = vld [vmem:[#allocation8 + $0x150] sm:$0xf]
        %v758 = vld [vmem:[#allocation8 + $0x154] sm:$0xf]
        %v759 = vld [vmem:[#allocation8 + $0x158] sm:$0xf]
        %v760 = vld [vmem:[#allocation8 + $0x15c] sm:$0xf]
        %v761 = vld [vmem:[#allocation8 + $0x160] sm:$0xf]
        %v762 = vld [vmem:[#allocation8 + $0x164] sm:$0xf]
        %v763 = vld [vmem:[#allocation8 + $0x168] sm:$0xf]
        %v764 = vld [vmem:[#allocation8 + $0x16c] sm:$0xf]
        %v765 = vld [vmem:[#allocation8 + $0x170] sm:$0xf]
        %v766 = vld [vmem:[#allocation8 + $0x174] sm:$0xf]
        %v767 = vld [vmem:[#allocation8 + $0x178] sm:$0xf]
        %v768 = vld [vmem:[#allocation8 + $0x17c] sm:$0xf]
        %v769 = vld [vmem:[#allocation8 + $0x180] sm:$0xf]
        %v770 = vld [vmem:[#allocation8 + $0x184] sm:$0xf]
        %v771 = vld [vmem:[#allocation8 + $0x188] sm:$0xf]
        %v772 = vld [vmem:[#allocation8 + $0x18c] sm:$0xf]
        %v773 = vld [vmem:[#allocation8 + $0x190] sm:$0xf]
        %v774 = vld [vmem:[#allocation8 + $0x194] sm:$0xf]
        %v775 = vld [vmem:[#allocation8 + $0x198] sm:$0xf]
        %v776 = vld [vmem:[#allocation8 + $0x19c] sm:$0xf]
        %v777 = vld [vmem:[#allocation8 + $0x1a0] sm:$0xf]
        %v778 = vld [vmem:[#allocation8 + $0x1a4] sm:$0xf]
        %v779 = vld [vmem:[#allocation8 + $0x1a8] sm:$0xf]
        %v780 = vld [vmem:[#allocation8 + $0x1ac] sm:$0xf]
        %v781 = vld [vmem:[#allocation8 + $0x1b0] sm:$0xf]
        %v782 = vld [vmem:[#allocation8 + $0x1b4] sm:$0xf]
        %v783 = vld [vmem:[#allocation8 + $0x1b8] sm:$0xf]
        %v784 = vld [vmem:[#allocation8 + $0x1bc] sm:$0xf]
        %v785 = vld [vmem:[#allocation8 + $0x1c0] sm:$0xf]
        %v786 = vld [vmem:[#allocation8 + $0x1c4] sm:$0xf]
        %v787 = vld [vmem:[#allocation8 + $0x1c8] sm:$0xf]
        %v788 = vld [vmem:[#allocation8 + $0x1cc] sm:$0xf]
        %v789 = vld [vmem:[#allocation8 + $0x1d0] sm:$0xf]
        %v790 = vld [vmem:[#allocation8 + $0x1d4] sm:$0xf]
        %v791 = vld [vmem:[#allocation8 + $0x1d8] sm:$0xf]
        %v792 = vld [vmem:[#allocation8 + $0x1dc] sm:$0xf]
        %v793 = vld [vmem:[#allocation8 + $0x1e0] sm:$0xf]
        %v794 = vld [vmem:[#allocation8 + $0x1e4] sm:$0xf]
        %v795 = vld [vmem:[#allocation8 + $0x1e8] sm:$0xf]
        %v796 = vld [vmem:[#allocation8 + $0x1ec] sm:$0xf]
        %v797 = vld [vmem:[#allocation8 + $0x1f0] sm:$0xf]
        %v798 = vld [vmem:[#allocation8 + $0x1f4] sm:$0xf]
        %v799 = vld [vmem:[#allocation8 + $0x1f8] sm:$0xf]
        %v800 = vld [vmem:[#allocation8 + $0x1fc] sm:$0xf]
        %v801 = vld [vmem:[#allocation8 + $0x200] sm:$0xf]
        %v802 = vld [vmem:[#allocation8 + $0x204] sm:$0xf]
        %v803 = vld [vmem:[#allocation8 + $0x208] sm:$0xf]
        %v804 = vld [vmem:[#allocation8 + $0x20c] sm:$0xf]
        %v805 = vld [vmem:[#allocation8 + $0x210] sm:$0xf]
        %v806 = vld [vmem:[#allocation8 + $0x214] sm:$0xf]
        %v807 = vld [vmem:[#allocation8 + $0x218] sm:$0xf]
        %v808 = vld [vmem:[#allocation8 + $0x21c] sm:$0xf]
        %v809 = vld [vmem:[#allocation8 + $0x220] sm:$0xf]
        %v810 = vld [vmem:[#allocation8 + $0x224] sm:$0xf]
        %v811 = vld [vmem:[#allocation8 + $0x228] sm:$0xf]
        %v812 = vld [vmem:[#allocation8 + $0x22c] sm:$0xf]
        %v813 = vld [vmem:[#allocation8 + $0x230] sm:$0xf]
        %v814 = vld [vmem:[#allocation8 + $0x234] sm:$0xf]
        %v815 = vld [vmem:[#allocation8 + $0x238] sm:$0xf]
        %v816 = vld [vmem:[#allocation8 + $0x23c] sm:$0xf]
        %v817 = vld [vmem:[%s4] sm:$0x1]
        %v819 = vlaneseq
        %v820 = vshrl.u32 %v819, 7
        %v821 = vsub.s32 0, %v820
        %v822 = vrot.slane %v817, %v821
        %v968 = vunpack.c.l.b16 %v673
        %v969 = vunpack.c.l.b16 %v674
        %v970 = vunpack.c.l.b16 %v675
        %v971 = vunpack.c.l.b16 %v676
        %v972 = vunpack.c.l.b16 %v677
        %v973 = vunpack.c.l.b16 %v678
        %v974 = vunpack.c.l.b16 %v679
        %v975 = vunpack.c.l.b16 %v680
        %v976 = vunpack.c.l.b16 %v681
        %v977 = vunpack.c.l.b16 %v682
        %v978 = vunpack.c.l.b16 %v683
        %v979 = vunpack.c.l.b16 %v684
        %v980 = vunpack.c.l.b16 %v685
        %v981 = vunpack.c.l.b16 %v686
        %v982 = vunpack.c.l.b16 %v687
        %v983 = vunpack.c.l.b16 %v688
        %v984 = vunpack.c.l.b16 %v689
        %v985 = vunpack.c.l.b16 %v690
        %v986 = vunpack.c.l.b16 %v691
        %v987 = vunpack.c.l.b16 %v692
        %v988 = vunpack.c.l.b16 %v693
        %v989 = vunpack.c.l.b16 %v694
        %v990 = vunpack.c.l.b16 %v695
        %v991 = vunpack.c.l.b16 %v696
        %v992 = vunpack.c.l.b16 %v697
        %v993 = vunpack.c.l.b16 %v698
        %v994 = vunpack.c.l.b16 %v699
        %v995 = vunpack.c.l.b16 %v700
        %v996 = vunpack.c.l.b16 %v701
        %v997 = vunpack.c.l.b16 %v702
        %v998 = vunpack.c.l.b16 %v703
        %v999 = vunpack.c.l.b16 %v704
        %v1000 = vunpack.c.l.b16 %v705
        %v1001 = vunpack.c.l.b16 %v706
        %v1002 = vunpack.c.l.b16 %v707
        %v1003 = vunpack.c.l.b16 %v708
        %v1004 = vunpack.c.l.b16 %v709
        %v1005 = vunpack.c.l.b16 %v710
        %v1006 = vunpack.c.l.b16 %v711
        %v1007 = vunpack.c.l.b16 %v712
        %v1008 = vunpack.c.l.b16 %v713
        %v1009 = vunpack.c.l.b16 %v714
        %v1010 = vunpack.c.l.b16 %v715
        %v1011 = vunpack.c.l.b16 %v716
        %v1012 = vunpack.c.l.b16 %v717
        %v1013 = vunpack.c.l.b16 %v718
        %v1014 = vunpack.c.l.b16 %v719
        %v1015 = vunpack.c.l.b16 %v720
        %v1016 = vunpack.c.l.b16 %v721
        %v1017 = vunpack.c.l.b16 %v722
        %v1018 = vunpack.c.l.b16 %v723
        %v1019 = vunpack.c.l.b16 %v724
        %v1020 = vunpack.c.l.b16 %v725
        %v1021 = vunpack.c.l.b16 %v726
        %v1022 = vunpack.c.l.b16 %v727
        %v1023 = vunpack.c.l.b16 %v728
        %v1024 = vunpack.c.l.b16 %v729
        %v1025 = vunpack.c.l.b16 %v730
        %v1026 = vunpack.c.l.b16 %v731
        %v1027 = vunpack.c.l.b16 %v732
        %v1028 = vunpack.c.l.b16 %v733
        %v1029 = vunpack.c.l.b16 %v734
        %v1030 = vunpack.c.l.b16 %v735
        %v1031 = vunpack.c.l.b16 %v736
        %v1032 = vunpack.c.l.b16 %v737
        %v1033 = vunpack.c.l.b16 %v738
        %v1034 = vunpack.c.l.b16 %v739
        %v1035 = vunpack.c.l.b16 %v740
        %v1036 = vunpack.c.l.b16 %v741
        %v1037 = vunpack.c.l.b16 %v742
        %v1038 = vunpack.c.l.b16 %v743
        %v1039 = vunpack.c.l.b16 %v744
        %v1040 = vunpack.c.l.b16 %v745
        %v1041 = vunpack.c.l.b16 %v746
        %v1042 = vunpack.c.l.b16 %v747
        %v1043 = vunpack.c.l.b16 %v748
        %v1044 = vunpack.c.l.b16 %v749
        %v1045 = vunpack.c.l.b16 %v750
        %v1046 = vunpack.c.l.b16 %v751
        %v1047 = vunpack.c.l.b16 %v752
        %v1048 = vunpack.c.l.b16 %v753
        %v1049 = vunpack.c.l.b16 %v754
        %v1050 = vunpack.c.l.b16 %v755
        %v1051 = vunpack.c.l.b16 %v756
        %v1052 = vunpack.c.l.b16 %v757
        %v1053 = vunpack.c.l.b16 %v758
        %v1054 = vunpack.c.l.b16 %v759
        %v1055 = vunpack.c.l.b16 %v760
        %v1056 = vunpack.c.l.b16 %v761
        %v1057 = vunpack.c.l.b16 %v762
        %v1058 = vunpack.c.l.b16 %v763
        %v1059 = vunpack.c.l.b16 %v764
        %v1060 = vunpack.c.l.b16 %v765
        %v1061 = vunpack.c.l.b16 %v766
        %v1062 = vunpack.c.l.b16 %v767
        %v1063 = vunpack.c.l.b16 %v768
        %v1064 = vunpack.c.l.b16 %v769
        %v1065 = vunpack.c.l.b16 %v770
        %v1066 = vunpack.c.l.b16 %v771
        %v1067 = vunpack.c.l.b16 %v772
        %v1068 = vunpack.c.l.b16 %v773
        %v1069 = vunpack.c.l.b16 %v774
        %v1070 = vunpack.c.l.b16 %v775
        %v1071 = vunpack.c.l.b16 %v776
        %v1072 = vunpack.c.l.b16 %v777
        %v1073 = vunpack.c.l.b16 %v778
        %v1074 = vunpack.c.l.b16 %v779
        %v1075 = vunpack.c.l.b16 %v780
        %v1076 = vunpack.c.l.b16 %v781
        %v1077 = vunpack.c.l.b16 %v782
        %v1078 = vunpack.c.l.b16 %v783
        %v1079 = vunpack.c.l.b16 %v784
        %v1080 = vunpack.c.l.b16 %v785
        %v1081 = vunpack.c.l.b16 %v786
        %v1082 = vunpack.c.l.b16 %v787
        %v1083 = vunpack.c.l.b16 %v788
        %v1084 = vunpack.c.l.b16 %v789
        %v1085 = vunpack.c.l.b16 %v790
        %v1086 = vunpack.c.l.b16 %v791
        %v1087 = vunpack.c.l.b16 %v792
        %v1088 = vunpack.c.l.b16 %v793
        %v1089 = vunpack.c.l.b16 %v794
        %v1090 = vunpack.c.l.b16 %v795
        %v1091 = vunpack.c.l.b16 %v796
        %v1092 = vunpack.c.l.b16 %v797
        %v1093 = vunpack.c.l.b16 %v798
        %v1094 = vunpack.c.l.b16 %v799
        %v1095 = vunpack.c.l.b16 %v800
        %v1096 = vunpack.c.l.b16 %v801
        %v1097 = vunpack.c.l.b16 %v802
        %v1098 = vunpack.c.l.b16 %v803
        %v1099 = vunpack.c.l.b16 %v804
        %v1100 = vunpack.c.l.b16 %v805
        %v1101 = vunpack.c.l.b16 %v806
        %v1102 = vunpack.c.l.b16 %v807
        %v1103 = vunpack.c.l.b16 %v808
        %v1104 = vunpack.c.l.b16 %v809
        %v1105 = vunpack.c.l.b16 %v810
        %v1106 = vunpack.c.l.b16 %v811
        %v1107 = vunpack.c.l.b16 %v812
        %v1108 = vunpack.c.l.b16 %v813
        %v1109 = vunpack.c.l.b16 %v814
        %v1110 = vunpack.c.l.b16 %v815
        %v1111 = vunpack.c.l.b16 %v816
        %v1112 = vpack.c.b16 %v969, %v968
        %v1113 = vpack.c.b16 %v971, %v970
        %v1114 = vpack.c.b16 %v973, %v972
        %v1115 = vpack.c.b16 %v975, %v974
        %v1116 = vpack.c.b16 %v977, %v976
        %v1117 = vpack.c.b16 %v979, %v978
        %v1118 = vpack.c.b16 %v981, %v980
        %v1119 = vpack.c.b16 %v983, %v982
        %v1120 = vpack.c.b16 %v985, %v984
        %v1121 = vpack.c.b16 %v987, %v986
        %v1122 = vpack.c.b16 %v989, %v988
        %v1123 = vpack.c.b16 %v991, %v990
        %v1124 = vpack.c.b16 %v993, %v992
        %v1125 = vpack.c.b16 %v995, %v994
        %v1126 = vpack.c.b16 %v997, %v996
        %v1127 = vpack.c.b16 %v999, %v998
        %v1128 = vpack.c.b16 %v1001, %v1000
        %v1129 = vpack.c.b16 %v1003, %v1002
        %v1130 = vpack.c.b16 %v1005, %v1004
        %v1131 = vpack.c.b16 %v1007, %v1006
        %v1132 = vpack.c.b16 %v1009, %v1008
        %v1133 = vpack.c.b16 %v1011, %v1010
        %v1134 = vpack.c.b16 %v1013, %v1012
        %v1135 = vpack.c.b16 %v1015, %v1014
        %v1136 = vpack.c.b16 %v1017, %v1016
        %v1137 = vpack.c.b16 %v1019, %v1018
        %v1138 = vpack.c.b16 %v1021, %v1020
        %v1139 = vpack.c.b16 %v1023, %v1022
        %v1140 = vpack.c.b16 %v1025, %v1024
        %v1141 = vpack.c.b16 %v1027, %v1026
        %v1142 = vpack.c.b16 %v1029, %v1028
        %v1143 = vpack.c.b16 %v1031, %v1030
        %v1144 = vpack.c.b16 %v1033, %v1032
        %v1145 = vpack.c.b16 %v1035, %v1034
        %v1146 = vpack.c.b16 %v1037, %v1036
        %v1147 = vpack.c.b16 %v1039, %v1038
        %v1148 = vpack.c.b16 %v1041, %v1040
        %v1149 = vpack.c.b16 %v1043, %v1042
        %v1150 = vpack.c.b16 %v1045, %v1044
        %v1151 = vpack.c.b16 %v1047, %v1046
        %v1152 = vpack.c.b16 %v1049, %v1048
        %v1153 = vpack.c.b16 %v1051, %v1050
        %v1154 = vpack.c.b16 %v1053, %v1052
        %v1155 = vpack.c.b16 %v1055, %v1054
        %v1156 = vpack.c.b16 %v1057, %v1056
        %v1157 = vpack.c.b16 %v1059, %v1058
        %v1158 = vpack.c.b16 %v1061, %v1060
        %v1159 = vpack.c.b16 %v1063, %v1062
        %v1160 = vpack.c.b16 %v1065, %v1064
        %v1161 = vpack.c.b16 %v1067, %v1066
        %v1162 = vpack.c.b16 %v1069, %v1068
        %v1163 = vpack.c.b16 %v1071, %v1070
        %v1164 = vpack.c.b16 %v1073, %v1072
        %v1165 = vpack.c.b16 %v1075, %v1074
        %v1166 = vpack.c.b16 %v1077, %v1076
        %v1167 = vpack.c.b16 %v1079, %v1078
        %v1168 = vpack.c.b16 %v1081, %v1080
        %v1169 = vpack.c.b16 %v1083, %v1082
        %v1170 = vpack.c.b16 %v1085, %v1084
        %v1171 = vpack.c.b16 %v1087, %v1086
        %v1172 = vpack.c.b16 %v1089, %v1088
        %v1173 = vpack.c.b16 %v1091, %v1090
        %v1174 = vpack.c.b16 %v1093, %v1092
        %v1175 = vpack.c.b16 %v1095, %v1094
        %v1176 = vpack.c.b16 %v1097, %v1096
        %v1177 = vpack.c.b16 %v1099, %v1098
        %v1178 = vpack.c.b16 %v1101, %v1100
        %v1179 = vpack.c.b16 %v1103, %v1102
        %v1180 = vpack.c.b16 %v1105, %v1104
        %v1181 = vpack.c.b16 %v1107, %v1106
        %v1182 = vpack.c.b16 %v1109, %v1108
        %v1183 = vpack.c.b16 %v1111, %v1110
        %1256 = vmatprep.subr.bf16.mxu0 0
        %1257 = vmatpush1.bf16.msra.mxu0 %v1112
        %1258 = vmatprep.subr.bf16.mxu0 0
        %1259 = vmatpush1.bf16.msra.mxu0 %v1113
        %1260 = vmatprep.subr.bf16.mxu0 0
        %1261 = vmatpush1.bf16.msra.mxu0 %v1114
        %1262 = vmatprep.subr.bf16.mxu0 0
        %1263 = vmatpush1.bf16.msra.mxu0 %v1115
        %1264 = vmatprep.subr.bf16.mxu0 0
        %1265 = vmatpush1.bf16.msra.mxu0 %v1116
        %1266 = vmatprep.subr.bf16.mxu0 0
        %1267 = vmatpush1.bf16.msra.mxu0 %v1117
        %1268 = vmatprep.subr.bf16.mxu0 0
        %1269 = vmatpush1.bf16.msra.mxu0 %v1118
        %1270 = vmatprep.subr.bf16.mxu0 0
        %1271 = vmatpush1.bf16.msra.mxu0 %v1119
        %1272 = vmatprep.subr.bf16.mxu0 0
        %1273 = vmatpush1.bf16.msra.mxu0 %v1120
        %1274 = vmatprep.subr.bf16.mxu0 0
        %1275 = vmatpush1.bf16.msra.mxu0 %v1121
        %1276 = vmatprep.subr.bf16.mxu0 0
        %1277 = vmatpush1.bf16.msra.mxu0 %v1122
        %1278 = vmatprep.subr.bf16.mxu0 0
        %1279 = vmatpush1.bf16.msra.mxu0 %v1123
        %1280 = vmatprep.subr.bf16.mxu0 0
        %1281 = vmatpush1.bf16.msra.mxu0 %v1124
        %1282 = vmatprep.subr.bf16.mxu0 0
        %1283 = vmatpush1.bf16.msra.mxu0 %v1125
        %1284 = vmatprep.subr.bf16.mxu0 0
        %1285 = vmatpush1.bf16.msra.mxu0 %v1126
        %1286 = vmatprep.subr.bf16.mxu0 0
        %1287 = vmatpush1.bf16.msra.mxu0 %v1127
        %1288 = vmatprep.mubr.bf16.mxu0 %v638
        %1289 = vmatmul.mubr.bf16.gmra.mrb[0].mxu0 %v637
        %v1290 = vpop.f32.mrb[0].mxu0
        %v1291 = vadd.f32 %v822, %v1290
        %v1292 = vpop.f32.mrb[0].mxu0
        %v1293 = vpop.f32.mrb[0].mxu0
        %v1294 = vadd.f32 %v822, %v1293
        %v1295 = vpop.f32.mrb[0].mxu0
        %1296 = vmatprep.mubr.bf16.mxu0 %v647
        %1297 = vmatmul.mubr.bf16.gmra.mrb[0].mxu0 %v646
        %v1298 = vpop.f32.mrb[0].mxu0
        %v1299 = vadd.f32 %v822, %v1298
        %v1300 = vpop.f32.mrb[0].mxu0
        %v1301 = vpop.f32.mrb[0].mxu0
        %v1302 = vadd.f32 %v822, %v1301
        %v1303 = vpop.f32.mrb[0].mxu0
        %1304 = vmatprep.mubr.bf16.mxu0 %v656
        %1305 = vmatmul.mubr.bf16.gmra.mrb[0].mxu0 %v655
        %v1306 = vpop.f32.mrb[0].mxu0
        %v1307 = vadd.f32 %v822, %v1306
        %v1308 = vpop.f32.mrb[0].mxu0
        %v1309 = vpop.f32.mrb[0].mxu0
        %v1310 = vadd.f32 %v822, %v1309
        %v1311 = vpop.f32.mrb[0].mxu0
        %1312 = vmatprep.mubr.bf16.mxu0 %v665
        %1313 = vmatmul.mubr.bf16.gmra.mrb[0].mxu0 %v664
        %v1314 = vpop.f32.mrb[0].mxu0
        %v1315 = vadd.f32 %v822, %v1314
        %v1316 = vpop.f32.mrb[0].mxu0
        %v1317 = vpop.f32.mrb[0].mxu0
        %v1318 = vadd.f32 %v822, %v1317
        %v1319 = vpop.f32.mrb[0].mxu0
        %1320 = vdwg.mxu0
        %1321 = vmatprep.subr.bf16.mxu0 0
        %1322 = vmatpush1.bf16.msra.mxu0 %v1128
        %1323 = vmatprep.subr.bf16.mxu0 0
        %1324 = vmatpush1.bf16.msra.mxu0 %v1129
        %1325 = vmatprep.subr.bf16.mxu0 0
        %1326 = vmatpush1.bf16.msra.mxu0 %v1130
        %1327 = vmatprep.subr.bf16.mxu0 0
        %1328 = vmatpush1.bf16.msra.mxu0 %v1131
        %1329 = vmatprep.subr.bf16.mxu0 0
        %1330 = vmatpush1.bf16.msra.mxu0 %v1132
        %1331 = vmatprep.subr.bf16.mxu0 0
        %1332 = vmatpush1.bf16.msra.mxu0 %v1133
        %1333 = vmatprep.subr.bf16.mxu0 0
        %1334 = vmatpush1.bf16.msra.mxu0 %v1134
        %1335 = vmatprep.subr.bf16.mxu0 0
        %1336 = vmatpush1.bf16.msra.mxu0 %v1135
        %1337 = vmatprep.subr.bf16.mxu0 0
        %1338 = vmatpush1.bf16.msra.mxu0 %v1136
        %1339 = vmatprep.subr.bf16.mxu0 0
        %1340 = vmatpush1.bf16.msra.mxu0 %v1137
        %1341 = vmatprep.subr.bf16.mxu0 0
        %1342 = vmatpush1.bf16.msra.mxu0 %v1138
        %1343 = vmatprep.subr.bf16.mxu0 0
        %1344 = vmatpush1.bf16.msra.mxu0 %v1139
        %1345 = vmatprep.subr.bf16.mxu0 0
        %1346 = vmatpush1.bf16.msra.mxu0 %v1140
        %1347 = vmatprep.subr.bf16.mxu0 0
        %1348 = vmatpush1.bf16.msra.mxu0 %v1141
        %1349 = vmatprep.subr.bf16.mxu0 0
        %1350 = vmatpush1.bf16.msra.mxu0 %v1142
        %1351 = vmatprep.subr.bf16.mxu0 0
        %1352 = vmatpush1.bf16.msra.mxu0 %v1143
        %1353 = vmatprep.mubr.bf16.mxu0 %v640
        %1354 = vmatmul.mubr.bf16.gmra.mrb[0].mxu0 %v639
        %v1355 = vpop.f32.mrb[0].mxu0
        %v1356 = vadd.f32 %v1291, %v1355
        %v1357 = vpop.f32.mrb[0].mxu0
        %v1358 = vpop.f32.mrb[0].mxu0
        %v1359 = vadd.f32 %v1294, %v1358
        %v1360 = vpop.f32.mrb[0].mxu0
        %1361 = vmatprep.mubr.bf16.mxu0 %v649
        %1362 = vmatmul.mubr.bf16.gmra.mrb[0].mxu0 %v648
        %v1363 = vpop.f32.mrb[0].mxu0
        %v1364 = vadd.f32 %v1299, %v1363
        %v1365 = vpop.f32.mrb[0].mxu0
        %v1366 = vpop.f32.mrb[0].mxu0
        %v1367 = vadd.f32 %v1302, %v1366
        %v1368 = vpop.f32.mrb[0].mxu0
        %1369 = vmatprep.mubr.bf16.mxu0 %v658
        %1370 = vmatmul.mubr.bf16.gmra.mrb[0].mxu0 %v657
        %v1371 = vpop.f32.mrb[0].mxu0
        %v1372 = vadd.f32 %v1307, %v1371
        %v1373 = vpop.f32.mrb[0].mxu0
        %v1374 = vpop.f32.mrb[0].mxu0
        %v1375 = vadd.f32 %v1310, %v1374
        %v1376 = vpop.f32.mrb[0].mxu0
        %1377 = vmatprep.mubr.bf16.mxu0 %v667
        %1378 = vmatmul.mubr.bf16.gmra.mrb[0].mxu0 %v666
        %v1379 = vpop.f32.mrb[0].mxu0
        %v1380 = vadd.f32 %v1315, %v1379
        %v1381 = vpop.f32.mrb[0].mxu0
        %v1382 = vpop.f32.mrb[0].mxu0
        %v1383 = vadd.f32 %v1318, %v1382
        %v1384 = vpop.f32.mrb[0].mxu0
        %1385 = vdwg.mxu0
        %1386 = vmatprep.subr.bf16.mxu0 0
        %1387 = vmatpush1.bf16.msra.mxu0 %v1144
        %1388 = vmatprep.subr.bf16.mxu0 0
        %1389 = vmatpush1.bf16.msra.mxu0 %v1145
        %1390 = vmatprep.subr.bf16.mxu0 0
        %1391 = vmatpush1.bf16.msra.mxu0 %v1146
        %1392 = vmatprep.subr.bf16.mxu0 0
        %1393 = vmatpush1.bf16.msra.mxu0 %v1147
        %1394 = vmatprep.subr.bf16.mxu0 0
        %1395 = vmatpush1.bf16.msra.mxu0 %v1148
        %1396 = vmatprep.subr.bf16.mxu0 0
        %1397 = vmatpush1.bf16.msra.mxu0 %v1149
        %1398 = vmatprep.subr.bf16.mxu0 0
        %1399 = vmatpush1.bf16.msra.mxu0 %v1150
        %1400 = vmatprep.subr.bf16.mxu0 0
        %1401 = vmatpush1.bf16.msra.mxu0 %v1151
        %1402 = vmatprep.subr.bf16.mxu0 0
        %1403 = vmatpush1.bf16.msra.mxu0 %v1152
        %1404 = vmatprep.subr.bf16.mxu0 0
        %1405 = vmatpush1.bf16.msra.mxu0 %v1153
        %1406 = vmatprep.subr.bf16.mxu0 0
        %1407 = vmatpush1.bf16.msra.mxu0 %v1154
        %1408 = vmatprep.subr.bf16.mxu0 0
        %1409 = vmatpush1.bf16.msra.mxu0 %v1155
        %1410 = vmatprep.subr.bf16.mxu0 0
        %1411 = vmatpush1.bf16.msra.mxu0 %v1156
        %1412 = vmatprep.subr.bf16.mxu0 0
        %1413 = vmatpush1.bf16.msra.mxu0 %v1157
        %1414 = vmatprep.subr.bf16.mxu0 0
        %1415 = vmatpush1.bf16.msra.mxu0 %v1158
        %1416 = vmatprep.subr.bf16.mxu0 0
        %1417 = vmatpush1.bf16.msra.mxu0 %v1159
        %1418 = vmatprep.mubr.bf16.mxu0 %v642
        %1419 = vmatmul.mubr.bf16.gmra.mrb[0].mxu0 %v641
        %v1420 = vpop.f32.mrb[0].mxu0
        %v1421 = vadd.f32 %v1356, %v1420
        %v1422 = vpop.f32.mrb[0].mxu0
        %v1423 = vpop.f32.mrb[0].mxu0
        %v1424 = vadd.f32 %v1359, %v1423
        %v1425 = vpop.f32.mrb[0].mxu0
        %1426 = vmatprep.mubr.bf16.mxu0 %v651
        %1427 = vmatmul.mubr.bf16.gmra.mrb[0].mxu0 %v650
        %v1428 = vpop.f32.mrb[0].mxu0
        %v1429 = vadd.f32 %v1364, %v1428
        %v1430 = vpop.f32.mrb[0].mxu0
        %v1431 = vpop.f32.mrb[0].mxu0
        %v1432 = vadd.f32 %v1367, %v1431
        %v1433 = vpop.f32.mrb[0].mxu0
        %1434 = vmatprep.mubr.bf16.mxu0 %v660
        %1435 = vmatmul.mubr.bf16.gmra.mrb[0].mxu0 %v659
        %v1436 = vpop.f32.mrb[0].mxu0
        %v1437 = vadd.f32 %v1372, %v1436
        %v1438 = vpop.f32.mrb[0].mxu0
        %v1439 = vpop.f32.mrb[0].mxu0
        %v1440 = vadd.f32 %v1375, %v1439
        %v1441 = vpop.f32.mrb[0].mxu0
        %1442 = vmatprep.mubr.bf16.mxu0 %v669
        %1443 = vmatmul.mubr.bf16.gmra.mrb[0].mxu0 %v668
        %v1444 = vpop.f32.mrb[0].mxu0
        %v1445 = vadd.f32 %v1380, %v1444
        %v1446 = vpop.f32.mrb[0].mxu0
        %v1447 = vpop.f32.mrb[0].mxu0
        %v1448 = vadd.f32 %v1383, %v1447
        %v1449 = vpop.f32.mrb[0].mxu0
        %1450 = vdwg.mxu0
        %1451 = vmatprep.subr.bf16.mxu0 0
        %1452 = vmatpush1.bf16.msra.mxu0 %v1160
        %1453 = vmatprep.subr.bf16.mxu0 0
        %1454 = vmatpush1.bf16.msra.mxu0 %v1161
        %1455 = vmatprep.subr.bf16.mxu0 0
        %1456 = vmatpush1.bf16.msra.mxu0 %v1162
        %1457 = vmatprep.subr.bf16.mxu0 0
        %1458 = vmatpush1.bf16.msra.mxu0 %v1163
        %1459 = vmatprep.subr.bf16.mxu0 0
        %1460 = vmatpush1.bf16.msra.mxu0 %v1164
        %1461 = vmatprep.subr.bf16.mxu0 0
        %1462 = vmatpush1.bf16.msra.mxu0 %v1165
        %1463 = vmatprep.subr.bf16.mxu0 0
        %1464 = vmatpush1.bf16.msra.mxu0 %v1166
        %1465 = vmatprep.subr.bf16.mxu0 0
        %1466 = vmatpush1.bf16.msra.mxu0 %v1167
        %1467 = vmatprep.subr.bf16.mxu0 0
        %1468 = vmatpush1.bf16.msra.mxu0 %v1168
        %1469 = vmatprep.subr.bf16.mxu0 0
        %1470 = vmatpush1.bf16.msra.mxu0 %v1169
        %1471 = vmatprep.subr.bf16.mxu0 0
        %1472 = vmatpush1.bf16.msra.mxu0 %v1170
        %1473 = vmatprep.subr.bf16.mxu0 0
        %1474 = vmatpush1.bf16.msra.mxu0 %v1171
        %1475 = vmatprep.subr.bf16.mxu0 0
        %1476 = vmatpush1.bf16.msra.mxu0 %v1172
        %1477 = vmatprep.subr.bf16.mxu0 0
        %1478 = vmatpush1.bf16.msra.mxu0 %v1173
        %1479 = vmatprep.subr.bf16.mxu0 0
        %1480 = vmatpush1.bf16.msra.mxu0 %v1174
        %1481 = vmatprep.subr.bf16.mxu0 0
        %1482 = vmatpush1.bf16.msra.mxu0 %v1175
        %1483 = vmatprep.mubr.bf16.mxu0 %v644
        %1484 = vmatmul.mubr.bf16.gmra.mrb[0].mxu0 %v643
        %v1485 = vpop.f32.mrb[0].mxu0
        %v1486 = vadd.f32 %v1421, %v1485
        %v1487 = vpop.f32.mrb[0].mxu0
        %v1488 = vpop.f32.mrb[0].mxu0
        %v1489 = vadd.f32 %v1424, %v1488
        %v1490 = vpop.f32.mrb[0].mxu0
        %1491 = vmatprep.mubr.bf16.mxu0 %v653
        %1492 = vmatmul.mubr.bf16.gmra.mrb[0].mxu0 %v652
        %v1493 = vpop.f32.mrb[0].mxu0
        %v1494 = vadd.f32 %v1429, %v1493
        %v1495 = vpop.f32.mrb[0].mxu0
        %v1496 = vpop.f32.mrb[0].mxu0
        %v1497 = vadd.f32 %v1432, %v1496
        %v1498 = vpop.f32.mrb[0].mxu0
        %1499 = vmatprep.mubr.bf16.mxu0 %v662
        %1500 = vmatmul.mubr.bf16.gmra.mrb[0].mxu0 %v661
        %v1501 = vpop.f32.mrb[0].mxu0
        %v1502 = vadd.f32 %v1437, %v1501
        %v1503 = vpop.f32.mrb[0].mxu0
        %v1504 = vpop.f32.mrb[0].mxu0
        %v1505 = vadd.f32 %v1440, %v1504
        %v1506 = vpop.f32.mrb[0].mxu0
        %1507 = vmatprep.mubr.bf16.mxu0 %v671
        %1508 = vmatmul.mubr.bf16.gmra.mrb[0].mxu0 %v670
        %v1509 = vpop.f32.mrb[0].mxu0
        %v1510 = vadd.f32 %v1445, %v1509
        %v1511 = vpop.f32.mrb[0].mxu0
        %v1512 = vpop.f32.mrb[0].mxu0
        %v1513 = vadd.f32 %v1448, %v1512
        %v1514 = vpop.f32.mrb[0].mxu0
        %1515 = vdwg.mxu0
        %1516 = vmatprep.subr.bf16.mxu0 0
        %1517 = vmatpush1.bf16.msra.mxu0 %v1176
        %1518 = vmatprep.subr.bf16.mxu0 0
        %1519 = vmatpush1.bf16.msra.mxu0 %v1177
        %1520 = vmatprep.subr.bf16.mxu0 0
        %1521 = vmatpush1.bf16.msra.mxu0 %v1178
        %1522 = vmatprep.subr.bf16.mxu0 0
        %1523 = vmatpush1.bf16.msra.mxu0 %v1179
        %1524 = vmatprep.subr.bf16.mxu0 0
        %1525 = vmatpush1.bf16.msra.mxu0 %v1180
        %1526 = vmatprep.subr.bf16.mxu0 0
        %1527 = vmatpush1.bf16.msra.mxu0 %v1181
        %1528 = vmatprep.subr.bf16.mxu0 0
        %1529 = vmatpush1.bf16.msra.mxu0 %v1182
        %1530 = vmatprep.subr.bf16.mxu0 0
        %1531 = vmatpush1.bf16.msra.mxu0 %v1183
        %1532 = vmatprep.subr.bf16.mxu0 0
        %1533 = vmatpush1.bf16.msra.mxu0 0
        %1534 = vmatprep.subr.bf16.mxu0 0
        %1535 = vmatpush1.bf16.msra.mxu0 0
        %1536 = vmatprep.subr.bf16.mxu0 0
        %1537 = vmatpush1.bf16.msra.mxu0 0
        %1538 = vmatprep.subr.bf16.mxu0 0
        %1539 = vmatpush1.bf16.msra.mxu0 0
        %1540 = vmatprep.subr.bf16.mxu0 0
        %1541 = vmatpush1.bf16.msra.mxu0 0
        %1542 = vmatprep.subr.bf16.mxu0 0
        %1543 = vmatpush1.bf16.msra.mxu0 0
        %1544 = vmatprep.subr.bf16.mxu0 0
        %1545 = vmatpush1.bf16.msra.mxu0 0
        %1546 = vmatprep.subr.bf16.mxu0 0
        %1547 = vmatpush1.bf16.msra.mxu0 0
        %1548 = vmatprep.mubr.bf16.mxu0 0
        %1549 = vmatmul.mubr.bf16.gmra.mrb[0].mxu0 %v645
        %v1550 = vpop.f32.mrb[0].mxu0
        %v1551 = vadd.f32 %v1486, %v1550
        %v1552 = vpop.f32.mrb[0].mxu0
        %v1553 = vpop.f32.mrb[0].mxu0
        %v1554 = vadd.f32 %v1489, %v1553
        %v1555 = vpop.f32.mrb[0].mxu0
        %1556 = vmatprep.mubr.bf16.mxu0 0
        %1557 = vmatmul.mubr.bf16.gmra.mrb[0].mxu0 %v654
        %v1558 = vpop.f32.mrb[0].mxu0
        %v1559 = vadd.f32 %v1494, %v1558
        %v1560 = vpop.f32.mrb[0].mxu0
        %v1561 = vpop.f32.mrb[0].mxu0
        %v1562 = vadd.f32 %v1497, %v1561
        %v1563 = vpop.f32.mrb[0].mxu0
        %1564 = vmatprep.mubr.bf16.mxu0 0
        %1565 = vmatmul.mubr.bf16.gmra.mrb[0].mxu0 %v663
        %v1566 = vpop.f32.mrb[0].mxu0
        %v1567 = vadd.f32 %v1502, %v1566
        %v1568 = vpop.f32.mrb[0].mxu0
        %v1569 = vpop.f32.mrb[0].mxu0
        %v1570 = vadd.f32 %v1505, %v1569
        %v1571 = vpop.f32.mrb[0].mxu0
        %1572 = vmatprep.mubr.bf16.mxu0 0
        %1573 = vmatmul.mubr.bf16.gmra.mrb[0].mxu0 %v672
        %v1574 = vpop.f32.mrb[0].mxu0
        %v1575 = vadd.f32 %v1510, %v1574
        %v1576 = vpop.f32.mrb[0].mxu0
        %v1577 = vpop.f32.mrb[0].mxu0
        %v1578 = vadd.f32 %v1513, %v1577
        %v1579 = vpop.f32.mrb[0].mxu0
        %1580 = vdwg.mxu0
        %v1581 = vmul.f32 %v1551, 0.5
        %v1582 = vmul.f32 %v1554, 0.5
        %v1583 = vmul.f32 %v1559, 0.5
        %v1584 = vmul.f32 %v1562, 0.5
        %v1585 = vmul.f32 %v1567, 0.5
        %v1586 = vmul.f32 %v1570, 0.5
        %v1587 = vmul.f32 %v1575, 0.5
        %v1588 = vmul.f32 %v1578, 0.5
        %v1589 = vmul.f32 %v1551, 0.70710677
        %v1590 = vmul.f32 %v1554, 0.70710677
        %v1591 = vmul.f32 %v1559, 0.70710677
        %v1592 = vmul.f32 %v1562, 0.70710677
        %v1593 = vmul.f32 %v1567, 0.70710677
        %v1594 = vmul.f32 %v1570, 0.70710677
        %v1595 = vmul.f32 %v1575, 0.70710677
        %v1596 = vmul.f32 %v1578, 0.70710677
        %v1597 = verf.f32.pop %v1589
        %v1598 = verf.f32.pop %v1590
        %v1599 = verf.f32.pop %v1591
        %v1600 = verf.f32.pop %v1592
        %v1601 = verf.f32.pop %v1593
        %v1602 = verf.f32.pop %v1594
        %v1603 = verf.f32.pop %v1595
        %v1604 = verf.f32.pop %v1596
        %v1605 = vadd.f32 %v1597, 1.0
        %v1606 = vadd.f32 %v1598, 1.0
        %v1607 = vadd.f32 %v1599, 1.0
        %v1608 = vadd.f32 %v1600, 1.0
        %v1609 = vadd.f32 %v1601, 1.0
        %v1610 = vadd.f32 %v1602, 1.0
        %v1611 = vadd.f32 %v1603, 1.0
        %v1612 = vadd.f32 %v1604, 1.0
        %v1613 = vmul.f32 %v1581, %v1605
        %v1614 = vmul.f32 %v1582, %v1606
        %v1615 = vmul.f32 %v1583, %v1607
        %v1616 = vmul.f32 %v1584, %v1608
        %v1617 = vmul.f32 %v1585, %v1609
        %v1618 = vmul.f32 %v1586, %v1610
        %v1619 = vmul.f32 %v1587, %v1611
        %v1620 = vmul.f32 %v1588, %v1612
        %v1621 = vpack.c.bf16 %v1614, %v1613
        %v1622 = vpack.c.bf16 %v1616, %v1615
        %v1623 = vpack.c.bf16 %v1618, %v1617
        %v1624 = vpack.c.bf16 %v1620, %v1619
        %v1625 = vld [vmem:[#allocation9] sm:$0xf]
        %v1626 = vld [vmem:[#allocation9 + $0x4] sm:$0xf]
        %v1627 = vld [vmem:[#allocation9 + $0x8] sm:$0xf]
        %v1628 = vld [vmem:[#allocation9 + $0xc] sm:$0xf]
        %v1629 = vld [vmem:[#allocation9 + $0x10] sm:$0xf]
        %v1630 = vld [vmem:[#allocation9 + $0x14] sm:$0xf]
        %v1631 = vld [vmem:[#allocation9 + $0x18] sm:$0xf]
        %v1632 = vld [vmem:[#allocation9 + $0x1c] sm:$0xf]
        %v1633 = vld [vmem:[#allocation9 + $0x20] sm:$0xf]
        %v1634 = vld [vmem:[#allocation9 + $0x24] sm:$0xf]
        %v1635 = vld [vmem:[#allocation9 + $0x28] sm:$0xf]
        %v1636 = vld [vmem:[#allocation9 + $0x2c] sm:$0xf]
        %v1637 = vld [vmem:[#allocation9 + $0x30] sm:$0xf]
        %v1638 = vld [vmem:[#allocation9 + $0x34] sm:$0xf]
        %v1639 = vld [vmem:[#allocation9 + $0x38] sm:$0xf]
        %v1640 = vld [vmem:[#allocation9 + $0x3c] sm:$0xf]
        %v1641 = vld [vmem:[%s6] sm:$0x1]
        %v1643 = vlaneseq
        %v1644 = vshrl.u32 %v1643, 7
        %v1645 = vsub.s32 0, %v1644
        %v1646 = vrot.slane %v1641, %v1645
        %v1664 = vunpack.c.l.b16 %v1625
        %v1665 = vunpack.c.l.b16 %v1626
        %v1666 = vunpack.c.l.b16 %v1627
        %v1667 = vunpack.c.l.b16 %v1628
        %v1668 = vunpack.c.l.b16 %v1629
        %v1669 = vunpack.c.l.b16 %v1630
        %v1670 = vunpack.c.l.b16 %v1631
        %v1671 = vunpack.c.l.b16 %v1632
        %v1672 = vunpack.c.l.b16 %v1633
        %v1673 = vunpack.c.l.b16 %v1634
        %v1674 = vunpack.c.l.b16 %v1635
        %v1675 = vunpack.c.l.b16 %v1636
        %v1676 = vunpack.c.l.b16 %v1637
        %v1677 = vunpack.c.l.b16 %v1638
        %v1678 = vunpack.c.l.b16 %v1639
        %v1679 = vunpack.c.l.b16 %v1640
        %v1680 = vpack.c.b16 %v1665, %v1664
        %v1681 = vpack.c.b16 %v1667, %v1666
        %v1682 = vpack.c.b16 %v1669, %v1668
        %v1683 = vpack.c.b16 %v1671, %v1670
        %v1684 = vpack.c.b16 %v1673, %v1672
        %v1685 = vpack.c.b16 %v1675, %v1674
        %v1686 = vpack.c.b16 %v1677, %v1676
        %v1687 = vpack.c.b16 %v1679, %v1678
        %1696 = vmatprep.subr.bf16.mxu0 0
        %1697 = vmatpush1.bf16.msra.mxu0 %v1680
        %1698 = vmatprep.subr.bf16.mxu0 0
        %1699 = vmatpush1.bf16.msra.mxu0 %v1681
        %1700 = vmatprep.subr.bf16.mxu0 0
        %1701 = vmatpush1.bf16.msra.mxu0 %v1682
        %1702 = vmatprep.subr.bf16.mxu0 0
        %1703 = vmatpush1.bf16.msra.mxu0 %v1683
        %1704 = vmatprep.subr.bf16.mxu0 0
        %1705 = vmatpush1.bf16.msra.mxu0 %v1684
        %1706 = vmatprep.subr.bf16.mxu0 0
        %1707 = vmatpush1.bf16.msra.mxu0 %v1685
        %1708 = vmatprep.subr.bf16.mxu0 0
        %1709 = vmatpush1.bf16.msra.mxu0 %v1686
        %1710 = vmatprep.subr.bf16.mxu0 0
        %1711 = vmatpush1.bf16.msra.mxu0 %v1687
        %1712 = vmatprep.subr.bf16.mxu0 0
        %1713 = vmatpush1.bf16.msra.mxu0 0
        %1714 = vmatprep.subr.bf16.mxu0 0
        %1715 = vmatpush1.bf16.msra.mxu0 0
        %1716 = vmatprep.subr.bf16.mxu0 0
        %1717 = vmatpush1.bf16.msra.mxu0 0
        %1718 = vmatprep.subr.bf16.mxu0 0
        %1719 = vmatpush1.bf16.msra.mxu0 0
        %1720 = vmatprep.subr.bf16.mxu0 0
        %1721 = vmatpush1.bf16.msra.mxu0 0
        %1722 = vmatprep.subr.bf16.mxu0 0
        %1723 = vmatpush1.bf16.msra.mxu0 0
        %1724 = vmatprep.subr.bf16.mxu0 0
        %1725 = vmatpush1.bf16.msra.mxu0 0
        %1726 = vmatprep.subr.bf16.mxu0 0
        %1727 = vmatpush1.bf16.msra.mxu0 0
        %1728 = vmatprep.mubr.bf16.mxu0 0
        %1729 = vmatmul.mubr.bf16.gmra.mrb[0].mxu0 %v1621
        %v1730 = vpop.f32.mrb[0].mxu0
        %v1731 = vadd.f32 %v1646, %v1730
        %v1732 = vpop.f32.mrb[0].mxu0
        %v1733 = vpop.f32.mrb[0].mxu0
        %v1734 = vadd.f32 %v1646, %v1733
        %v1735 = vpop.f32.mrb[0].mxu0
        %1736 = vmatprep.mubr.bf16.mxu0 0
        %1737 = vmatmul.mubr.bf16.gmra.mrb[0].mxu0 %v1622
        %v1738 = vpop.f32.mrb[0].mxu0
        %v1739 = vadd.f32 %v1646, %v1738
        %v1740 = vpop.f32.mrb[0].mxu0
        %v1741 = vpop.f32.mrb[0].mxu0
        %v1742 = vadd.f32 %v1646, %v1741
        %v1743 = vpop.f32.mrb[0].mxu0
        %1744 = vmatprep.mubr.bf16.mxu0 0
        %1745 = vmatmul.mubr.bf16.gmra.mrb[0].mxu0 %v1623
        %v1746 = vpop.f32.mrb[0].mxu0
        %v1747 = vadd.f32 %v1646, %v1746
        %v1748 = vpop.f32.mrb[0].mxu0
        %v1749 = vpop.f32.mrb[0].mxu0
        %v1750 = vadd.f32 %v1646, %v1749
        %v1751 = vpop.f32.mrb[0].mxu0
        %1752 = vmatprep.mubr.bf16.mxu0 0
        %1753 = vmatmul.mubr.bf16.gmra.mrb[0].mxu0 %v1624
        %v1754 = vpop.f32.mrb[0].mxu0
        %v1755 = vadd.f32 %v1646, %v1754
        %v1756 = vpop.f32.mrb[0].mxu0
        %v1757 = vpop.f32.mrb[0].mxu0
        %v1758 = vadd.f32 %v1646, %v1757
        %v1759 = vpop.f32.mrb[0].mxu0
        %1760 = vdwg.mxu0
        %v1761 = vld [vmem:[%s298] sm:$0xff]
        %v1762 = vld [vmem:[%s298 + $0x8] sm:$0xff]
        %v1763 = vld [vmem:[%s298 + $0x10] sm:$0xff]
        %v1764 = vld [vmem:[%s298 + $0x18] sm:$0xff]
        %v1765 = vld [vmem:[%s298 + $0x20] sm:$0xff]
        %v1766 = vld [vmem:[%s298 + $0x28] sm:$0xff]
        %v1767 = vld [vmem:[%s298 + $0x30] sm:$0xff]
        %v1768 = vld [vmem:[%s298 + $0x38] sm:$0xff]
        %v1769 = vadd.f32 %v1731, %v1761
        %v1770 = vadd.f32 %v1734, %v1762
        %v1771 = vadd.f32 %v1739, %v1763
        %v1772 = vadd.f32 %v1742, %v1764
        %v1773 = vadd.f32 %v1747, %v1765
        %v1774 = vadd.f32 %v1750, %v1766
        %v1775 = vadd.f32 %v1755, %v1767
        %v1776 = vadd.f32 %v1758, %v1768
        %v1777 = vmul.f32 %v1769, 0.5
        %v1778 = vmul.f32 %v1770, 0.5
        %v1779 = vmul.f32 %v1771, 0.5
        %v1780 = vmul.f32 %v1772, 0.5
        %v1781 = vmul.f32 %v1773, 0.5
        %v1782 = vmul.f32 %v1774, 0.5
        %v1783 = vmul.f32 %v1775, 0.5
        %v1784 = vmul.f32 %v1776, 0.5
        %v1785 = vmul.f32 %v1769, 0.70710677
        %v1786 = vmul.f32 %v1770, 0.70710677
        %v1787 = vmul.f32 %v1771, 0.70710677
        %v1788 = vmul.f32 %v1772, 0.70710677
        %v1789 = vmul.f32 %v1773, 0.70710677
        %v1790 = vmul.f32 %v1774, 0.70710677
        %v1791 = vmul.f32 %v1775, 0.70710677
        %v1792 = vmul.f32 %v1776, 0.70710677
        %v1793 = verf.f32.pop %v1785
        %v1794 = verf.f32.pop %v1786
        %v1795 = verf.f32.pop %v1787
        %v1796 = verf.f32.pop %v1788
        %v1797 = verf.f32.pop %v1789
        %v1798 = verf.f32.pop %v1790
        %v1799 = verf.f32.pop %v1791
        %v1800 = verf.f32.pop %v1792
        %v1801 = vadd.f32 %v1793, 1.0
        %v1802 = vadd.f32 %v1794, 1.0
        %v1803 = vadd.f32 %v1795, 1.0
        %v1804 = vadd.f32 %v1796, 1.0
        %v1805 = vadd.f32 %v1797, 1.0
        %v1806 = vadd.f32 %v1798, 1.0
        %v1807 = vadd.f32 %v1799, 1.0
        %v1808 = vadd.f32 %v1800, 1.0
        %v1809 = vmul.f32 %v1777, %v1801
        %v1810 = vmul.f32 %v1778, %v1802
        %v1811 = vmul.f32 %v1779, %v1803
        %v1812 = vmul.f32 %v1780, %v1804
        %v1813 = vmul.f32 %v1781, %v1805
        %v1814 = vmul.f32 %v1782, %v1806
        %v1815 = vmul.f32 %v1783, %v1807
        %v1816 = vmul.f32 %v1784, %v1808
        %1817 = vst [vmem:[%s340] sm:$0xff] %v1809
        %1818 = vst [vmem:[%s340 + $0x8] sm:$0xff] %v1810
        %1819 = vst [vmem:[%s340 + $0x10] sm:$0xff] %v1811
        %1820 = vst [vmem:[%s340 + $0x18] sm:$0xff] %v1812
        %1821 = vst [vmem:[%s340 + $0x20] sm:$0xff] %v1813
        %1822 = vst [vmem:[%s340 + $0x28] sm:$0xff] %v1814
        %1823 = vst [vmem:[%s340 + $0x30] sm:$0xff] %v1815
        %1824 = vst [vmem:[%s340 + $0x38] sm:$0xff] %v1816
        %s1825 = sand.u32 %s186, 1
        %s1826 = scalar_lea.sflag [#allocation5], %s1825
        %s1827 = sand.u32 %s186, 1
        %s1828 = smul.addr %s1827, 64
        %s1829 = scalar_lea.vmem [#allocation11], %s1828
        // Predicated region
        $region65: #{tpu_custom_call.1} parent=47 // pred_check
          %p1830 = pneg %p196
        $region66: #{tpu_custom_call.1} parent=47 // pred_check_branch
          %1832 = sbr.rel (%p1830) target = $region68
        $region67: #{tpu_custom_call.1} parent=47 // pred_region
          %s1834 = ssub.s32 1024, 1024
          %1835 = vsyncadd %s1826, %s1834
          %s1836 = smul.addr %s26, 8
          %s1837 = smul.addr %s1836, 128
          %s1838 = scalar_lea.hbm %s7, %s1837
          %s1839 = sshll.u32 %s1829, 4
          %s1840 = int_to_ptr.vmem [resolvable:$true] %s1839
          %1845 = dma.vmem_to_hbm [thread:$0]  %s1840, 1024, %s1838, %s1826, 128, 128, 8
        $region68: #{tpu_custom_call.1} parent=47 // pred_fallthru
          _
      $region48: #{tpu_custom_call.1} parent=5 // pred_fallthru
        _
      %p1846 = scmp.le.s32.totalorder 2, %s21
      // Predicated region
      $region69: #{tpu_custom_call.1} parent=5 // pred_check
        %p1847 = pneg %p1846
      $region70: #{tpu_custom_call.1} parent=5 // pred_check_branch
        %1849 = sbr.rel (%p1847) target = $region72
      $region71: #{tpu_custom_call.1} parent=5 // pred_region
        %s1850 = ssub.s32 %s21, 2
        // Predicated region
        $region73: #{tpu_custom_call.1} parent=71 // pred_check
          %p1851 = pneg %p202
        $region74: #{tpu_custom_call.1} parent=71 // pred_check_branch
          %1853 = sbr.rel (%p1851) target = $region76
        $region75: #{tpu_custom_call.1} parent=71 // pred_region
          %s1854 = sand.u32 %s187, 1
          %s1855 = scalar_lea.sflag [#allocation5], %s1854
          %s1856 = sand.u32 %s187, 1
          %s1857 = smul.addr %s1856, 64
          %s1858 = scalar_lea.vmem [#allocation11], %s1857
          %1859 = dma.done %s1855, 1024
        $region76: #{tpu_custom_call.1} parent=71 // pred_fallthru
          _
      $region72: #{tpu_custom_call.1} parent=5 // pred_fallthru
        _
    $region6: #{tpu_custom_call.1} parent=1 // loop_footer
      %s25 = sadd.s32 1, %s21
    $region7: #{tpu_custom_call.1} parent=1 // loop_footer_branch
      %20 = sbr.rel target = $region3
    $region8: #{tpu_custom_call.1} parent=1 // loop_exit
      _
    %1860 = vsyncpa [#allocation4], 1
    %s1861 = scalar_lea.sflag [#allocation4], 1
    %1862 = vsyncpa %s1861, 1
    %1863 = vsyncpa [#allocation7], 1
    %1864 = vsyncpa [#allocation10], 1
    %1865 = vsyncpa [#allocation5], 1
    %s1866 = scalar_lea.sflag [#allocation5], 1
    %1867 = vsyncpa %s1866, 1

</llo_original>
